<compile_context>
chip_gen: v7x
topology: tpu7x:2x2x1
jax: 0.10.0
libtpu: 0.0.40
codegen_flags: <defaults>
</compile_context>

<pallas_src>
import functools
import math

import jax
import jax.numpy as jnp
from jax.experimental import pallas as pl
from jax.experimental.pallas import tpu as pltpu


# ---------------------------------------------------------------------------
# Kernels
# ---------------------------------------------------------------------------
def _gcn_hidden_kernel(x_ref, adj_ref, w_ref, b_ref, mask_ref, o_ref, acc_ref):
    """One GCN layer tile step, finalize = bias + relu + dropout mask."""
    k = pl.program_id(1)

    @pl.when(k == 0)
    def _():
        acc_ref[...] = jnp.zeros_like(acc_ref)

    # support[k] = X[k] @ W    (f32 MXU)
    support = jnp.dot(x_ref[...], w_ref[...], preferred_element_type=jnp.float32)
    # acc += adj[i, k] @ support[k]   (bf16 MXU, f32 accumulate)
    acc_ref[...] += jnp.dot(
        adj_ref[...], support.astype(jnp.bfloat16),
        preferred_element_type=jnp.float32)

    @pl.when(k == pl.num_programs(1) - 1)
    def _():
        h = acc_ref[...] + b_ref[...]
        h = jnp.maximum(h, 0.0) * mask_ref[...]      # relu + dropout (train mode)
        o_ref[...] = h.astype(o_ref.dtype)


def _gcn_logsoftmax_kernel(nclass, x_ref, adj_ref, w_ref, b_ref, o_ref, acc_ref):
    """One GCN layer tile step, finalize = bias + log_softmax over valid lanes."""
    k = pl.program_id(1)

    @pl.when(k == 0)
    def _():
        acc_ref[...] = jnp.zeros_like(acc_ref)

    support = jnp.dot(x_ref[...], w_ref[...], preferred_element_type=jnp.float32)
    acc_ref[...] += jnp.dot(
        adj_ref[...], support.astype(jnp.bfloat16),
        preferred_element_type=jnp.float32)

    @pl.when(k == pl.num_programs(1) - 1)
    def _():
        logits = acc_ref[...] + b_ref[...]
        # Mask zero-padded class lanes so they do not contribute to the softmax.
        lane = jax.lax.broadcasted_iota(jnp.int32, logits.shape, dimension=1)
        logits = jnp.where(lane < nclass, logits, -1e30)
        m = jnp.max(logits, axis=-1, keepdims=True)
        z = logits - m
        lse = jnp.log(jnp.sum(jnp.exp(z), axis=-1, keepdims=True))
        o_ref[...] = (z - lse).astype(o_ref.dtype)


# ---------------------------------------------------------------------------
# Layer wrapper
# ---------------------------------------------------------------------------
def _gcn_layer(x, adj_bf16, w_pad, b_pad, *, mask=None, nclass=None, tm=128, tk=128):
    """adj @ (x @ w_pad) + b_pad, with fused finalize (relu+dropout or log_softmax)."""
    N, f_in = x.shape
    f_pad = w_pad.shape[1]
    assert adj_bf16.shape == (N, N)
    assert N % tm == 0 and N % tk == 0
    grid = (N // tm, N // tk)

    in_specs = [
        pl.BlockSpec((tk, f_in), lambda i, k: (k, 0)),       # X rows of block k
        pl.BlockSpec((tm, tk), lambda i, k: (i, k)),         # adj tile (bf16)
        pl.BlockSpec((f_in, f_pad), lambda i, k: (0, 0)),    # W, VMEM-resident
        pl.BlockSpec((1, f_pad), lambda i, k: (0, 0)),       # bias, VMEM-resident
    ]
    args = [x, adj_bf16, w_pad, b_pad]

    if mask is not None:
        kernel = _gcn_hidden_kernel
        in_specs.append(pl.BlockSpec((tm, f_pad), lambda i, k: (i, 0)))
        args.append(mask)
        transcendentals = 0
    else:
        kernel = functools.partial(_gcn_logsoftmax_kernel, nclass)
        transcendentals = N * (f_pad + 1)                    # exp + log

    flops = 2 * N * f_in * f_pad * grid[0] + 2 * N * N * f_pad
    bytes_accessed = (
        N * N * adj_bf16.dtype.itemsize            # adjacency (dominant)
        + N * f_in * x.dtype.itemsize * grid[0]    # X re-read per row tile
        + f_in * f_pad * 4 + f_pad * 4             # weights + bias
        + N * f_pad * 4                            # output
    )

    return pl.pallas_call(
        kernel,
        out_shape=jax.ShapeDtypeStruct((N, f_pad), jnp.float32),
        grid_spec=pltpu.PrefetchScalarGridSpec(
            num_scalar_prefetch=0,
            grid=grid,
            in_specs=in_specs,
            out_specs=pl.BlockSpec((tm, f_pad), lambda i, k: (i, 0)),
            scratch_shapes=[pltpu.VMEM((tm, f_pad), jnp.float32)],
        ),
        compiler_params=pltpu.CompilerParams(
            dimension_semantics=("parallel", "arbitrary"),
        ),
        cost_estimate=pl.CostEstimate(
            flops=int(flops),
            transcendentals=int(transcendentals),
            bytes_accessed=int(bytes_accessed),
        ),
    )(*args)


# ---------------------------------------------------------------------------
# Full GCN forward (train mode)
# ---------------------------------------------------------------------------
def _round_up(v, m):
    return ((v + m - 1) // m) * m


def _pad_last(a, target):
    pad = target - a.shape[-1]
    if pad == 0:
        return a
    widths = [(0, 0)] * (a.ndim - 1) + [(0, pad)]
    return jnp.pad(a, widths)


def gcn_forward(x, adj, w1, b1, w2, b2, drop_mask):
    """relu(adj@(x@W1)+b1) -> dropout -> adj@(h@W2)+b2 -> log_softmax(dim=1)."""
    N = x.shape[0]
    hidden = w1.shape[1]
    nclass = w2.shape[1]
    h_pad = _round_up(hidden, 128)
    c_pad = _round_up(nclass, 128)

    # bf16 adjacency (dominant HBM traffic); accumulation stays f32 in-kernel.
    adj_bf16 = adj.astype(jnp.bfloat16)

    # Zero-pad feature dims to 128 lanes (lane-dense stores, full MXU width).
    w1p = _pad_last(w1, h_pad)                                   # [nfeat, h_pad]
    b1p = _pad_last(b1, h_pad).reshape(1, h_pad)
    w2p = jnp.zeros((h_pad, c_pad), w2.dtype).at[:hidden, :nclass].set(w2)
    b2p = _pad_last(b2, c_pad).reshape(1, c_pad)
    maskp = _pad_last(drop_mask, h_pad)                          # [N, h_pad]

    tm = 128 if N % 128 == 0 else N
    tk = tm

    h = _gcn_layer(x, adj_bf16, w1p, b1p, mask=maskp, tm=tm, tk=tk)
    y = _gcn_layer(h, adj_bf16, w2p, b2p, nclass=nclass, tm=tm, tk=tk)
    return y[:, :nclass]


# ---------------------------------------------------------------------------
# Demo / correctness check
# ---------------------------------------------------------------------------
if __name__ == "__main__":
    N, nfeat, hidden, nclass = 256, 128, 64, 16
    p_drop = 0.5

    key = jax.random.PRNGKey(0)
    k_x, k_adj, k_w1, k_b1, k_w2, k_b2, k_drop = jax.random.split(key, 7)

    # reset_parameters(): uniform(-stdv, stdv), stdv = 1/sqrt(out_features)
    stdv1 = 1.0 / math.sqrt(hidden)
    w1 = jax.random.uniform(k_w1, (nfeat, hidden), jnp.float32, -stdv1, stdv1)
    b1 = jax.random.uniform(k_b1, (hidden,), jnp.float32, -stdv1, stdv1)
    stdv2 = 1.0 / math.sqrt(nclass)
    w2 = jax.random.uniform(k_w2, (hidden, nclass), jnp.float32, -stdv2, stdv2)
    b2 = jax.random.uniform(k_b2, (nclass,), jnp.float32, -stdv2, stdv2)

    # Node features + dense row-normalized adjacency with self-loops.
    x = jax.random.normal(k_x, (N, nfeat), jnp.float32)
    adj_raw = (jax.random.uniform(k_adj, (N, N)) < 0.05).astype(jnp.float32)
    adj_raw = adj_raw + jnp.eye(N, dtype=jnp.float32)
    adj = adj_raw / jnp.sum(adj_raw, axis=1, keepdims=True)

    # Train-mode dropout keep mask (deterministic, generated host-side).
    keep = (jax.random.uniform(k_drop, (N, hidden)) >= p_drop).astype(jnp.float32)
    drop_mask = keep / (1.0 - p_drop)

    out = jax.jit(gcn_forward)(x, adj, w1, b1, w2, b2, drop_mask)
    out = jax.block_until_ready(out)
    assert out.shape == (N, nclass)

    # Reference mirroring the kernel's bf16 adjacency / support casts.
    adj_bf = adj.astype(jnp.bfloat16).astype(jnp.float32)
    bf = lambda a: a.astype(jnp.bfloat16).astype(jnp.float32)
    sup1 = x @ w1
    h_ref = jnp.maximum(adj_bf @ bf(sup1) + b1, 0.0) * drop_mask
    sup2 = h_ref @ w2
    ref = jax.nn.log_softmax(adj_bf @ bf(sup2) + b2, axis=1)
    assert jnp.allclose(out, ref, atol=5e-3, rtol=5e-3), float(
        jnp.max(jnp.abs(out - ref)))

    # Sanity vs exact f32 module semantics (loose: bf16 adjacency noise).
    h32 = jnp.maximum(adj @ (x @ w1) + b1, 0.0) * drop_mask
    ref32 = jax.nn.log_softmax(adj @ (h32 @ w2) + b2, axis=1)
    assert jnp.allclose(out, ref32, atol=5e-2, rtol=5e-2)

    print("KERNEL_OK")
</pallas_src>

<mosaic_0001>
module attributes {stable_mosaic.version = 11 : i64} {
  func.func @_gcn_hidden_kernel(%arg0: i32, %arg1: i32, %arg2: memref<128x128xf32, #tpu.memory_space<vmem>>, %arg3: memref<128x128xbf16, #tpu.memory_space<vmem>>, %arg4: memref<128x128xf32, #tpu.memory_space<vmem>>, %arg5: memref<1x128xf32, #tpu.memory_space<vmem>>, %arg6: memref<128x128xf32, #tpu.memory_space<vmem>>, %arg7: memref<128x128xf32, #tpu.memory_space<vmem>>, %arg8: memref<128x128xf32, #tpu.memory_space<vmem>>) attributes {dimension_semantics = [#tpu.dimension_semantics<parallel>, #tpu.dimension_semantics<arbitrary>], iteration_bounds = array<i64: 2, 2>, scalar_prefetch = 0 : i64, scratch_operands = 1 : i64, tpu.core_type = #tpu.core_type<tc>, window_params = [{transform_indices = @transform_0, window_bounds = array<i64: 128, 128>}, {transform_indices = @transform_1, window_bounds = array<i64: 128, 128>}, {pipeline_mode = #tpu.pipeline_mode<synchronous>, transform_indices = @transform_2, window_bounds = array<i64: 128, 128>}, {pipeline_mode = #tpu.pipeline_mode<synchronous>, transform_indices = @transform_3, window_bounds = array<i64: 1, 128>}, {transform_indices = @transform_4, window_bounds = array<i64: 128, 128>}, {transform_indices = @transform_5, window_bounds = array<i64: 128, 128>}]} {
    %c0_i32 = arith.constant 0 : i32
    %0 = arith.cmpi eq, %arg1, %c0_i32 : i32
    %1 = arith.extui %0 : i1 to i32
    %c0_i32_0 = arith.constant 0 : i32
    %2 = arith.cmpi ne, %1, %c0_i32_0 : i32
    scf.if %2 {
      %cst_12 = arith.constant 0.000000e+00 : f32
      %15 = vector.broadcast %cst_12 : f32 to vector<128x128xf32>
      %c0_13 = arith.constant 0 : index
      %c0_14 = arith.constant 0 : index
      %16 = vector.load %arg8[%c0_13, %c0_14] : memref<128x128xf32, #tpu.memory_space<vmem>>, vector<128x128xf32>
      tpu.vector_store %arg8[%c0_13, %c0_14], %15 {strides = array<i32>} : memref<128x128xf32, #tpu.memory_space<vmem>>, vector<128x128xf32>,
    } else {
    }
    %c0 = arith.constant 0 : index
    %c0_1 = arith.constant 0 : index
    %3 = vector.load %arg2[%c0, %c0_1] : memref<128x128xf32, #tpu.memory_space<vmem>>, vector<128x128xf32>
    %c0_2 = arith.constant 0 : index
    %c0_3 = arith.constant 0 : index
    %4 = vector.load %arg4[%c0_2, %c0_3] : memref<128x128xf32, #tpu.memory_space<vmem>>, vector<128x128xf32>
    %cst = arith.constant dense<0.000000e+00> : vector<128x128xf32>
    %5 = tpu.matmul %3, %4, %cst {dimension_numbers = #tpu.dot_dimension_numbers<[1], [0], [0], [1], [0, 0, 1, 1], [], []>} : vector<128x128xf32>, vector<128x128xf32>, vector<128x128xf32> -> vector<128x128xf32>
    %c0_4 = arith.constant 0 : index
    %c0_5 = arith.constant 0 : index
    %6 = vector.load %arg8[%c0_4, %c0_5] : memref<128x128xf32, #tpu.memory_space<vmem>>, vector<128x128xf32>
    %c0_6 = arith.constant 0 : index
    %c0_7 = arith.constant 0 : index
    %7 = vector.load %arg3[%c0_6, %c0_7] : memref<128x128xbf16, #tpu.memory_space<vmem>>, vector<128x128xbf16>
    %8 = arith.truncf %5 : vector<128x128xf32> to vector<128x128xbf16>
    %cst_8 = arith.constant dense<0.000000e+00> : vector<128x128xf32>
    %9 = tpu.matmul %7, %8, %cst_8 {dimension_numbers = #tpu.dot_dimension_numbers<[1], [0], [0], [1], [0, 0, 1, 1], [], []>} : vector<128x128xbf16>, vector<128x128xbf16>, vector<128x128xf32> -> vector<128x128xf32>
    %10 = arith.addf %6, %9 : vector<128x128xf32>
    %c0_9 = arith.constant 0 : index
    %c0_10 = arith.constant 0 : index
    %11 = vector.load %arg8[%c0_9, %c0_10] : memref<128x128xf32, #tpu.memory_space<vmem>>, vector<128x128xf32>
    tpu.vector_store %arg8[%c0_9, %c0_10], %10 {strides = array<i32>} : memref<128x128xf32, #tpu.memory_space<vmem>>, vector<128x128xf32>,
    %c1_i32 = arith.constant 1 : i32
    %12 = arith.cmpi eq, %arg1, %c1_i32 : i32
    %13 = arith.extui %12 : i1 to i32
    %c0_i32_11 = arith.constant 0 : i32
    %14 = arith.cmpi ne, %13, %c0_i32_11 : i32
    scf.if %14 {
      %c0_12 = arith.constant 0 : index
      %c0_13 = arith.constant 0 : index
      %15 = vector.load %arg8[%c0_12, %c0_13] : memref<128x128xf32, #tpu.memory_space<vmem>>, vector<128x128xf32>
      %c0_14 = arith.constant 0 : index
      %c0_15 = arith.constant 0 : index
      %16 = vector.load %arg5[%c0_14, %c0_15] : memref<1x128xf32, #tpu.memory_space<vmem>>, vector<1x128xf32>
      %17 = vector.broadcast %16 : vector<1x128xf32> to vector<128x128xf32>
      %18 = arith.addf %15, %17 : vector<128x128xf32>
      %cst_16 = arith.constant 0.000000e+00 : f32
      %19 = vector.broadcast %cst_16 : f32 to vector<128x128xf32>
      %20 = arith.maximumf %18, %19 : vector<128x128xf32>
      %c0_17 = arith.constant 0 : index
      %c0_18 = arith.constant 0 : index
      %21 = vector.load %arg6[%c0_17, %c0_18] : memref<128x128xf32, #tpu.memory_space<vmem>>, vector<128x128xf32>
      %22 = arith.mulf %20, %21 : vector<128x128xf32>
      %c0_19 = arith.constant 0 : index
      %c0_20 = arith.constant 0 : index
      %23 = vector.load %arg7[%c0_19, %c0_20] : memref<128x128xf32, #tpu.memory_space<vmem>>, vector<128x128xf32>
      tpu.vector_store %arg7[%c0_19, %c0_20], %22 {strides = array<i32>} : memref<128x128xf32, #tpu.memory_space<vmem>>, vector<128x128xf32>,
    } else {
    }
    return
  }
  func.func @transform_0(%arg0: i32, %arg1: i32) -> (i32, i32) {
    %c0_i32 = arith.constant 0 : i32
    %c0_i32_0 = arith.constant 0 : i32
    return %arg1, %c0_i32 : i32, i32
  }
  func.func @transform_1(%arg0: i32, %arg1: i32) -> (i32, i32) {
    %c0_i32 = arith.constant 0 : i32
    return %arg0, %arg1 : i32, i32
  }
  func.func @transform_2(%arg0: i32, %arg1: i32) -> (i32, i32) {
    %c0_i32 = arith.constant 0 : i32
    %c0_i32_0 = arith.constant 0 : i32
    %c0_i32_1 = arith.constant 0 : i32
    return %c0_i32, %c0_i32_0 : i32, i32
  }
  func.func @transform_3(%arg0: i32, %arg1: i32) -> (i32, i32) {
    %c0_i32 = arith.constant 0 : i32
    %c0_i32_0 = arith.constant 0 : i32
    %c0_i32_1 = arith.constant 0 : i32
    return %c0_i32, %c0_i32_0 : i32, i32
  }
  func.func @transform_4(%arg0: i32, %arg1: i32) -> (i32, i32) {
    %c0_i32 = arith.constant 0 : i32
    %c0_i32_0 = arith.constant 0 : i32
    return %arg0, %c0_i32 : i32, i32
  }
  func.func @transform_5(%arg0: i32, %arg1: i32) -> (i32, i32) {
    %c0_i32 = arith.constant 0 : i32
    %c0_i32_0 = arith.constant 0 : i32
    return %arg0, %c0_i32 : i32, i32
  }
}

module attributes {stable_mosaic.version = 11 : i64} {
  func.func @_gcn_logsoftmax_kernel(%arg0: i32, %arg1: i32, %arg2: memref<128x128xf32, #tpu.memory_space<vmem>>, %arg3: memref<128x128xbf16, #tpu.memory_space<vmem>>, %arg4: memref<128x128xf32, #tpu.memory_space<vmem>>, %arg5: memref<1x128xf32, #tpu.memory_space<vmem>>, %arg6: memref<128x128xf32, #tpu.memory_space<vmem>>, %arg7: memref<128x128xf32, #tpu.memory_space<vmem>>) attributes {dimension_semantics = [#tpu.dimension_semantics<parallel>, #tpu.dimension_semantics<arbitrary>], iteration_bounds = array<i64: 2, 2>, scalar_prefetch = 0 : i64, scratch_operands = 1 : i64, tpu.core_type = #tpu.core_type<tc>, window_params = [{transform_indices = @transform_0, window_bounds = array<i64: 128, 128>}, {transform_indices = @transform_1, window_bounds = array<i64: 128, 128>}, {pipeline_mode = #tpu.pipeline_mode<synchronous>, transform_indices = @transform_2, window_bounds = array<i64: 128, 128>}, {pipeline_mode = #tpu.pipeline_mode<synchronous>, transform_indices = @transform_3, window_bounds = array<i64: 1, 128>}, {transform_indices = @transform_4, window_bounds = array<i64: 128, 128>}]} {
    %c0_i32 = arith.constant 0 : i32
    %0 = arith.cmpi eq, %arg1, %c0_i32 : i32
    %1 = arith.extui %0 : i1 to i32
    %c0_i32_0 = arith.constant 0 : i32
    %2 = arith.cmpi ne, %1, %c0_i32_0 : i32
    scf.if %2 {
      %cst_12 = arith.constant 0.000000e+00 : f32
      %15 = vector.broadcast %cst_12 : f32 to vector<128x128xf32>
      %c0_13 = arith.constant 0 : index
      %c0_14 = arith.constant 0 : index
      %16 = vector.load %arg7[%c0_13, %c0_14] : memref<128x128xf32, #tpu.memory_space<vmem>>, vector<128x128xf32>
      tpu.vector_store %arg7[%c0_13, %c0_14], %15 {strides = array<i32>} : memref<128x128xf32, #tpu.memory_space<vmem>>, vector<128x128xf32>,
    } else {
    }
    %c0 = arith.constant 0 : index
    %c0_1 = arith.constant 0 : index
    %3 = vector.load %arg2[%c0, %c0_1] : memref<128x128xf32, #tpu.memory_space<vmem>>, vector<128x128xf32>
    %c0_2 = arith.constant 0 : index
    %c0_3 = arith.constant 0 : index
    %4 = vector.load %arg4[%c0_2, %c0_3] : memref<128x128xf32, #tpu.memory_space<vmem>>, vector<128x128xf32>
    %cst = arith.constant dense<0.000000e+00> : vector<128x128xf32>
    %5 = tpu.matmul %3, %4, %cst {dimension_numbers = #tpu.dot_dimension_numbers<[1], [0], [0], [1], [0, 0, 1, 1], [], []>} : vector<128x128xf32>, vector<128x128xf32>, vector<128x128xf32> -> vector<128x128xf32>
    %c0_4 = arith.constant 0 : index
    %c0_5 = arith.constant 0 : index
    %6 = vector.load %arg7[%c0_4, %c0_5] : memref<128x128xf32, #tpu.memory_space<vmem>>, vector<128x128xf32>
    %c0_6 = arith.constant 0 : index
    %c0_7 = arith.constant 0 : index
    %7 = vector.load %arg3[%c0_6, %c0_7] : memref<128x128xbf16, #tpu.memory_space<vmem>>, vector<128x128xbf16>
    %8 = arith.truncf %5 : vector<128x128xf32> to vector<128x128xbf16>
    %cst_8 = arith.constant dense<0.000000e+00> : vector<128x128xf32>
    %9 = tpu.matmul %7, %8, %cst_8 {dimension_numbers = #tpu.dot_dimension_numbers<[1], [0], [0], [1], [0, 0, 1, 1], [], []>} : vector<128x128xbf16>, vector<128x128xbf16>, vector<128x128xf32> -> vector<128x128xf32>
    %10 = arith.addf %6, %9 : vector<128x128xf32>
    %c0_9 = arith.constant 0 : index
    %c0_10 = arith.constant 0 : index
    %11 = vector.load %arg7[%c0_9, %c0_10] : memref<128x128xf32, #tpu.memory_space<vmem>>, vector<128x128xf32>
    tpu.vector_store %arg7[%c0_9, %c0_10], %10 {strides = array<i32>} : memref<128x128xf32, #tpu.memory_space<vmem>>, vector<128x128xf32>,
    %c1_i32 = arith.constant 1 : i32
    %12 = arith.cmpi eq, %arg1, %c1_i32 : i32
    %13 = arith.extui %12 : i1 to i32
    %c0_i32_11 = arith.constant 0 : i32
    %14 = arith.cmpi ne, %13, %c0_i32_11 : i32
    scf.if %14 {
      %c0_12 = arith.constant 0 : index
      %c0_13 = arith.constant 0 : index
      %15 = vector.load %arg7[%c0_12, %c0_13] : memref<128x128xf32, #tpu.memory_space<vmem>>, vector<128x128xf32>
      %c0_14 = arith.constant 0 : index
      %c0_15 = arith.constant 0 : index
      %16 = vector.load %arg5[%c0_14, %c0_15] : memref<1x128xf32, #tpu.memory_space<vmem>>, vector<1x128xf32>
      %17 = vector.broadcast %16 : vector<1x128xf32> to vector<128x128xf32>
      %18 = arith.addf %15, %17 : vector<128x128xf32>
      %19 = tpu.iota {dimensions = array<i32: 1>} : vector<128x128xi32>
      %c16_i32 = arith.constant 16 : i32
      %20 = vector.broadcast %c16_i32 : i32 to vector<128x128xi32>
      %21 = arith.cmpi slt, %19, %20 : vector<128x128xi32>
      %cst_16 = arith.constant -1.000000e+30 : f32
      %22 = vector.broadcast %cst_16 : f32 to vector<128x128xf32>
      %23 = arith.select %21, %18, %22 : vector<128x128xi1>, vector<128x128xf32>
      %cst_17 = arith.constant dense<0xFF800000> : vector<128xf32>
      %24 = vector.multi_reduction <maximumf>, %23, %cst_17 [1] : vector<128x128xf32> to vector<128xf32>
      %25 = vector.shape_cast %24 : vector<128xf32> to vector<128x1xf32>
      %26 = vector.broadcast %25 : vector<128x1xf32> to vector<128x128xf32>
      %27 = arith.subf %23, %26 : vector<128x128xf32>
      %28 = math.exp %27 : vector<128x128xf32>
      %cst_18 = arith.constant dense<0.000000e+00> : vector<128xf32>
      %29 = vector.multi_reduction <add>, %28, %cst_18 [1] : vector<128x128xf32> to vector<128xf32>
      %30 = vector.shape_cast %29 : vector<128xf32> to vector<128x1xf32>
      %31 = math.log %30 : vector<128x1xf32>
      %32 = vector.broadcast %31 : vector<128x1xf32> to vector<128x128xf32>
      %33 = arith.subf %27, %32 : vector<128x128xf32>
      %c0_19 = arith.constant 0 : index
      %c0_20 = arith.constant 0 : index
      %34 = vector.load %arg6[%c0_19, %c0_20] : memref<128x128xf32, #tpu.memory_space<vmem>>, vector<128x128xf32>
      tpu.vector_store %arg6[%c0_19, %c0_20], %33 {strides = array<i32>} : memref<128x128xf32, #tpu.memory_space<vmem>>, vector<128x128xf32>,
    } else {
    }
    return
  }
  func.func @transform_0(%arg0: i32, %arg1: i32) -> (i32, i32) {
    %c0_i32 = arith.constant 0 : i32
    %c0_i32_0 = arith.constant 0 : i32
    return %arg1, %c0_i32 : i32, i32
  }
  func.func @transform_1(%arg0: i32, %arg1: i32) -> (i32, i32) {
    %c0_i32 = arith.constant 0 : i32
    return %arg0, %arg1 : i32, i32
  }
  func.func @transform_2(%arg0: i32, %arg1: i32) -> (i32, i32) {
    %c0_i32 = arith.constant 0 : i32
    %c0_i32_0 = arith.constant 0 : i32
    %c0_i32_1 = arith.constant 0 : i32
    return %c0_i32, %c0_i32_0 : i32, i32
  }
  func.func @transform_3(%arg0: i32, %arg1: i32) -> (i32, i32) {
    %c0_i32 = arith.constant 0 : i32
    %c0_i32_0 = arith.constant 0 : i32
    %c0_i32_1 = arith.constant 0 : i32
    return %c0_i32, %c0_i32_0 : i32, i32
  }
  func.func @transform_4(%arg0: i32, %arg1: i32) -> (i32, i32) {
    %c0_i32 = arith.constant 0 : i32
    %c0_i32_0 = arith.constant 0 : i32
    return %arg0, %c0_i32 : i32, i32
  }
}

</mosaic_0001>

<llo_original>
// kernel: gcn_forward.3
$region0: #{gcn_forward.3}
  #allocation0 [shape = 'u32[]', space=smem, size = 0x4, offset = 0x4, fixed_abs, tag = 'smem constant byte address 0x4 - core index']
  #allocation1 [shape = 'u32[144,128]{1,0:T(1,128)}', space=vmem, size = 0x12000, scoped, tag = 'internal scratch']
  #allocation2 [shape = 'f32[128,128]{1,0:T(8,128)}', space=vmem, size = 0x10000, scoped, tag = 'scratch operand']
  %s0 = inlined_call_operand.vmem [shape: f32[256,128], index: 0, kind: input, shape index: {}]
  %s1 = inlined_call_operand.vmem [shape: bf16[256,256], index: 1, kind: input, shape index: {}]
  %s2 = inlined_call_operand.vmem [shape: f32[128,128], index: 2, kind: input, shape index: {}]
  %s3 = inlined_call_operand.vmem [shape: f32[1,128], index: 3, kind: input, shape index: {}]
  %s4 = inlined_call_operand.vmem [shape: f32[256,128], index: 4, kind: output, shape index: {}]
  %s5 = sld [smem:[#allocation0]]
  $region98: #{gcn_forward.3} parent=0
    _
  %s7 = ssub.s32 1, %s5
  %s8 = scalar_select 0, %s7, %s5
  $region1: #{gcn_forward.3} parent=0
    #allocation3 [shape = 'u8[65536]{0}', space=vmem, size = 0x10000, scoped, tag = 'input window, operand 1']
    loop: start=0, step=1, limit=6
    $region2: #{gcn_forward.3} parent=1 // loop_pre_header
      _
    $region3: #{gcn_forward.3} parent=1 // loop_header
      %s10 = sphi 0, %s14
      %p11 = scmp.ge.s32.totalorder %s10, 6
      %s17 = sphi 0, %s29
      %s18 = sphi 0, %s25
      %s19 = sphi 0, %s17
      %s20 = sphi 0, %s18
      %s21 = sphi 0, %s19
      %s22 = sphi 0, %s20
      %s32 = sphi 0, %s34
      %s35 = sphi 0, %s32
      %s36 = sphi 0, %s35
      %s52 = sphi 0, %s36
      %s60 = sphi 0, %s62
      %s63 = sphi 0, %s60
      %s64 = sphi 0, %s63
      %s80 = sphi 0, %s64
      %s84 = sphi 0, %s84
      %s86 = sphi 0, %s84
      %s87 = sphi 0, %s86
      %s101 = sphi 0, %s87
      %s105 = sphi 0, %s105
      %s107 = sphi 0, %s105
      %s108 = sphi 0, %s107
      %s122 = sphi 0, %s108
      %s128 = sphi 0, %s130
      %s131 = sphi 0, %s128
      %s132 = sphi 0, %s131
      %s148 = sphi 0, %s132
    $region4: #{gcn_forward.3} parent=1 // loop_header_branch
      %13 = sbr.rel (%p11) target = $region8
    $region5: #{gcn_forward.3} parent=1 // loop_body
      %s15 = ssub.s32 %s10, 1
      %s16 = ssub.s32 %s10, 2
      %s23 = sadd.s32 1, %s18
      %p24 = scmp.ge.s32.totalorder %s23, 2
      %s25 = scalar_select %p24, 0, %s23
      %s26 = sadd.s32 1, %s17
      %s27 = scalar_select %p24, %s26, %s17
      %p28 = scmp.ge.s32.totalorder %s27, 2
      %s29 = scalar_select %p28, 0, %s27
      %s30 = ssub.s32 %s18, %s25
      %p31 = scmp.eq.s32.totalorder %s30, 0
      %s33 = sadd.s32 %s32, 1
      %s34 = scalar_select %p31, %s32, %s33
      %p37 = pneg %p31
      %p38 = scmp.eq.s32.totalorder %s10, 3
      %p39 = por %p37, %p38
      %p40 = scmp.ne.s32.totalorder %s32, %s35
      %p41 = scmp.eq.s32.totalorder %s10, 0
      %p42 = por %p40, %p41
      %p43 = scmp.ne.s32.totalorder %s32, %s35
      %p44 = scmp.eq.s32.totalorder %s15, 3
      %p45 = por %p43, %p44
      %p46 = scmp.ne.s32.totalorder %s35, %s36
      %p47 = scmp.eq.s32.totalorder %s15, 0
      %p48 = por %p46, %p47
      %p49 = scmp.ne.s32.totalorder %s35, %s36
      %p50 = scmp.eq.s32.totalorder %s16, 3
      %p51 = por %p49, %p50
      %p53 = scmp.ne.s32.totalorder %s36, %s52
      %p54 = scmp.eq.s32.totalorder %s16, 0
      %p55 = por %p53, %p54
      %s56 = ssub.s32 %s17, %s29
      %s57 = ssub.s32 %s18, %s25
      %s58 = sor.u32 %s56, %s57
      %p59 = scmp.eq.s32.totalorder %s58, 0
      %s61 = sadd.s32 %s60, 1
      %s62 = scalar_select %p59, %s60, %s61
      %p65 = pneg %p59
      %p66 = scmp.eq.s32.totalorder %s10, 3
      %p67 = por %p65, %p66
      %p68 = scmp.ne.s32.totalorder %s60, %s63
      %p69 = scmp.eq.s32.totalorder %s10, 0
      %p70 = por %p68, %p69
      %p71 = scmp.ne.s32.totalorder %s60, %s63
      %p72 = scmp.eq.s32.totalorder %s15, 3
      %p73 = por %p71, %p72
      %p74 = scmp.ne.s32.totalorder %s63, %s64
      %p75 = scmp.eq.s32.totalorder %s15, 0
      %p76 = por %p74, %p75
      %p77 = scmp.ne.s32.totalorder %s63, %s64
      %p78 = scmp.eq.s32.totalorder %s16, 3
      %p79 = por %p77, %p78
      %p81 = scmp.ne.s32.totalorder %s64, %s80
      %p82 = scmp.eq.s32.totalorder %s16, 0
      %p83 = por %p81, %p82
      %s85 = sadd.s32 %s84, 1
      %p88 = scmp.eq.s32.totalorder %s10, 3
      %p89 = scmp.ne.s32.totalorder %s84, %s86
      %p90 = scmp.eq.s32.totalorder %s10, 0
      %p91 = por %p89, %p90
      %p92 = scmp.ne.s32.totalorder %s84, %s86
      %p93 = scmp.eq.s32.totalorder %s15, 3
      %p94 = por %p92, %p93
      %p95 = scmp.ne.s32.totalorder %s86, %s87
      %p96 = scmp.eq.s32.totalorder %s15, 0
      %p97 = por %p95, %p96
      %p98 = scmp.ne.s32.totalorder %s86, %s87
      %p99 = scmp.eq.s32.totalorder %s16, 3
      %p100 = por %p98, %p99
      %p102 = scmp.ne.s32.totalorder %s87, %s101
      %p103 = scmp.eq.s32.totalorder %s16, 0
      %p104 = por %p102, %p103
      %s106 = sadd.s32 %s105, 1
      %p109 = scmp.eq.s32.totalorder %s10, 3
      %p110 = scmp.ne.s32.totalorder %s105, %s107
      %p111 = scmp.eq.s32.totalorder %s10, 0
      %p112 = por %p110, %p111
      %p113 = scmp.ne.s32.totalorder %s105, %s107
      %p114 = scmp.eq.s32.totalorder %s15, 3
      %p115 = por %p113, %p114
      %p116 = scmp.ne.s32.totalorder %s107, %s108
      %p117 = scmp.eq.s32.totalorder %s15, 0
      %p118 = por %p116, %p117
      %p119 = scmp.ne.s32.totalorder %s107, %s108
      %p120 = scmp.eq.s32.totalorder %s16, 3
      %p121 = por %p119, %p120
      %p123 = scmp.ne.s32.totalorder %s108, %s122
      %p124 = scmp.eq.s32.totalorder %s16, 0
      %p125 = por %p123, %p124
      %s126 = ssub.s32 %s17, %s29
      %p127 = scmp.eq.s32.totalorder %s126, 0
      %s129 = sadd.s32 %s128, 1
      %s130 = scalar_select %p127, %s128, %s129
      %p133 = pneg %p127
      %p134 = scmp.eq.s32.totalorder %s10, 3
      %p135 = por %p133, %p134
      %p136 = scmp.ne.s32.totalorder %s128, %s131
      %p137 = scmp.eq.s32.totalorder %s10, 0
      %p138 = por %p136, %p137
      %p139 = scmp.ne.s32.totalorder %s128, %s131
      %p140 = scmp.eq.s32.totalorder %s15, 3
      %p141 = por %p139, %p140
      %p142 = scmp.ne.s32.totalorder %s131, %s132
      %p143 = scmp.eq.s32.totalorder %s15, 0
      %p144 = por %p142, %p143
      %p145 = scmp.ne.s32.totalorder %s131, %s132
      %p146 = scmp.eq.s32.totalorder %s16, 3
      %p147 = por %p145, %p146
      %p149 = scmp.ne.s32.totalorder %s132, %s148
      %p150 = scmp.eq.s32.totalorder %s16, 0
      %p151 = por %p149, %p150
      %p152 = scmp.le.s32.totalorder 1, %s10
      %p153 = scmp.lt.s32.totalorder %s10, 5
      %p154 = pnand %p152, %p153
      %p155 = pneg %p154
      // Predicated region
      $region9: #{gcn_forward.3} parent=5 // pred_check
        _
      $region10: #{gcn_forward.3} parent=5 // pred_check_branch
        %157 = sbr.rel (%p154) target = $region12
      $region11: #{gcn_forward.3} parent=5 // pred_region
        %s158 = ssub.s32 %s10, 1
        // Predicated region
        $region13: #{gcn_forward.3} parent=11 // pred_check
          %p159 = pneg %p97
        $region14: #{gcn_forward.3} parent=11 // pred_check_branch
          %161 = sbr.rel (%p159) target = $region16
        $region15: #{gcn_forward.3} parent=11 // pred_region
          _
        $region16: #{gcn_forward.3} parent=11 // pred_fallthru
          _
        // Predicated region
        $region17: #{gcn_forward.3} parent=11 // pred_check
          %p162 = pneg %p118
        $region18: #{gcn_forward.3} parent=11 // pred_check_branch
          %164 = sbr.rel (%p162) target = $region20
        $region19: #{gcn_forward.3} parent=11 // pred_region
          _
        $region20: #{gcn_forward.3} parent=11 // pred_fallthru
          _
      $region12: #{gcn_forward.3} parent=5 // pred_fallthru
        _
      %p165 = scmp.lt.s32.totalorder %s10, 4
      // Predicated region
      $region21: #{gcn_forward.3} parent=5 // pred_check
        %p166 = pneg %p165
      $region22: #{gcn_forward.3} parent=5 // pred_check_branch
        %168 = sbr.rel (%p166) target = $region24
      $region23: #{gcn_forward.3} parent=5 // pred_region
        // Predicated region
        $region25: #{gcn_forward.3} parent=23 // pred_check
          %p169 = pneg %p42
        $region26: #{gcn_forward.3} parent=23 // pred_check_branch
          %171 = sbr.rel (%p169) target = $region28
        $region27: #{gcn_forward.3} parent=23 // pred_region
          %s172 = smul.u32 16, %s18
          %p173 = scmp.lt.s32.totalorder %s172, 31
          %s174 = scalar_select %p173, %s172, 31
          %s175 = smul.addr %s174, 8
          %s176 = scalar_lea.vmem %s0, %s175
          %s177 = smul.u32 16, %s18
        $region28: #{gcn_forward.3} parent=23 // pred_fallthru
          _
        // Predicated region
        $region29: #{gcn_forward.3} parent=23 // pred_check
          %p178 = pneg %p70
        $region30: #{gcn_forward.3} parent=23 // pred_check_branch
          %180 = sbr.rel (%p178) target = $region32
        $region31: #{gcn_forward.3} parent=23 // pred_region
          %s181 = sand.u32 %s60, 1
          %s182 = sand.u32 %s60, 1
          %s183 = smul.addr %s182, 64
          %s184 = scalar_lea.vmem [#allocation3], %s183
          %s185 = smul.u32 16, %s17
          %s186 = smul.addr %s185, 2
          %s187 = sadd.s32 %s18, %s186
          %s188 = smul.addr %s187, 4
          %s189 = scalar_lea.vmem %s1, %s188
          // Predicated region
          $region33: #{gcn_forward.3} parent=31 // pred_check
            _
          $region34: #{gcn_forward.3} parent=31 // pred_check_branch
            %191 = sbr.rel (0) target = $region36
          $region35: #{gcn_forward.3} parent=31 // pred_region
            // Predicated region
            $region37: #{gcn_forward.3} parent=35 // pred_check
              _
            $region38: #{gcn_forward.3} parent=35 // pred_check_branch
              %193 = sbr.rel target = $region40
            $region39: #{gcn_forward.3} parent=35 // pred_region
              // Predicated region
              $region52: #{gcn_forward.3} parent=39 // pred_check
                _
              $region53: #{gcn_forward.3} parent=39 // pred_check_branch
                %238 = sbr.rel (0) target = $region55
              $region54: #{gcn_forward.3} parent=39 // pred_region
                loop: start=0, step=1, limit=1
                $region56: #{gcn_forward.3} parent=54 // loop_pre_header
                  _
                $region57: #{gcn_forward.3} parent=54 // loop_header
                  %s240 = sphi 0, %s244
                  %p241 = scmp.ge.s32.totalorder %s240, 1
                  %s245 = sphi %s189, %s189
                  %s246 = sphi %s184, %s184
                $region58: #{gcn_forward.3} parent=54 // loop_header_branch
                  %243 = sbr.rel (%p241) target = $region62
                $region59: #{gcn_forward.3} parent=54 // loop_body
                  _
                $region60: #{gcn_forward.3} parent=54 // loop_footer
                  %s244 = sadd.s32 1, %s240
                $region61: #{gcn_forward.3} parent=54 // loop_footer_branch
                  %239 = sbr.rel target = $region57
                $region62: #{gcn_forward.3} parent=54 // loop_exit
                  _
                loop: start=0, step=1, limit=1
                $region63: #{gcn_forward.3} parent=54 // loop_pre_header
                  _
                $region64: #{gcn_forward.3} parent=54 // loop_header
                  %s249 = sphi 0, %s253
                  %p250 = scmp.ge.s32.totalorder %s249, 1
                  %s254 = sphi %s189, %s189
                  %s255 = sphi %s184, %s184
                $region65: #{gcn_forward.3} parent=54 // loop_header_branch
                  %252 = sbr.rel (%p250) target = $region69
                $region66: #{gcn_forward.3} parent=54 // loop_body
                  %v256 = vld [vmem:[%s254] sm:$0xf]
                  %257 = vst [vmem:[%s255] sm:$0xf] %v256
                  %v258 = vld [vmem:[%s254 + $0x8] sm:$0xf]
                  %259 = vst [vmem:[%s255 + $0x4] sm:$0xf] %v258
                  %v260 = vld [vmem:[%s254 + $0x10] sm:$0xf]
                  %261 = vst [vmem:[%s255 + $0x8] sm:$0xf] %v260
                  %v262 = vld [vmem:[%s254 + $0x18] sm:$0xf]
                  %263 = vst [vmem:[%s255 + $0xc] sm:$0xf] %v262
                  %v264 = vld [vmem:[%s254 + $0x20] sm:$0xf]
                  %265 = vst [vmem:[%s255 + $0x10] sm:$0xf] %v264
                  %v266 = vld [vmem:[%s254 + $0x28] sm:$0xf]
                  %267 = vst [vmem:[%s255 + $0x14] sm:$0xf] %v266
                  %v268 = vld [vmem:[%s254 + $0x30] sm:$0xf]
                  %269 = vst [vmem:[%s255 + $0x18] sm:$0xf] %v268
                  %v270 = vld [vmem:[%s254 + $0x38] sm:$0xf]
                  %271 = vst [vmem:[%s255 + $0x1c] sm:$0xf] %v270
                  %v272 = vld [vmem:[%s254 + $0x40] sm:$0xf]
                  %273 = vst [vmem:[%s255 + $0x20] sm:$0xf] %v272
                  %v274 = vld [vmem:[%s254 + $0x48] sm:$0xf]
                  %275 = vst [vmem:[%s255 + $0x24] sm:$0xf] %v274
                  %v276 = vld [vmem:[%s254 + $0x50] sm:$0xf]
                  %277 = vst [vmem:[%s255 + $0x28] sm:$0xf] %v276
                  %v278 = vld [vmem:[%s254 + $0x58] sm:$0xf]
                  %279 = vst [vmem:[%s255 + $0x2c] sm:$0xf] %v278
                  %v280 = vld [vmem:[%s254 + $0x60] sm:$0xf]
                  %281 = vst [vmem:[%s255 + $0x30] sm:$0xf] %v280
                  %v282 = vld [vmem:[%s254 + $0x68] sm:$0xf]
                  %283 = vst [vmem:[%s255 + $0x34] sm:$0xf] %v282
                  %v284 = vld [vmem:[%s254 + $0x70] sm:$0xf]
                  %285 = vst [vmem:[%s255 + $0x38] sm:$0xf] %v284
                  %v286 = vld [vmem:[%s254 + $0x78] sm:$0xf]
                  %287 = vst [vmem:[%s255 + $0x3c] sm:$0xf] %v286
                $region67: #{gcn_forward.3} parent=54 // loop_footer
                  %s253 = sadd.s32 1, %s249
                $region68: #{gcn_forward.3} parent=54 // loop_footer_branch
                  %248 = sbr.rel target = $region64
                $region69: #{gcn_forward.3} parent=54 // loop_exit
                  _
              $region55: #{gcn_forward.3} parent=39 // pred_fallthru
                _
            $region40: #{gcn_forward.3} parent=35 // pred_fallthru
              _
            // Predicated region
            $region41: #{gcn_forward.3} parent=35 // pred_check
              _
            $region42: #{gcn_forward.3} parent=35 // pred_check_branch
              %195 = sbr.rel (0) target = $region44
            $region43: #{gcn_forward.3} parent=35 // pred_region
              loop: start=0, step=1, limit=1
              $region45: #{gcn_forward.3} parent=43 // loop_pre_header
                _
              $region46: #{gcn_forward.3} parent=43 // loop_header
                %s198 = sphi 0, %s202
                %p199 = scmp.ge.s32.totalorder %s198, 1
                %s203 = sphi %s189, %s189
                %s204 = sphi %s184, %s184
              $region47: #{gcn_forward.3} parent=43 // loop_header_branch
                %201 = sbr.rel (%p199) target = $region51
              $region48: #{gcn_forward.3} parent=43 // loop_body
                %v205 = vld [vmem:[%s203] sm:$0xf]
                %206 = vst [vmem:[%s204] sm:$0xf] %v205
                %v207 = vld [vmem:[%s203 + $0x8] sm:$0xf]
                %208 = vst [vmem:[%s204 + $0x4] sm:$0xf] %v207
                %v209 = vld [vmem:[%s203 + $0x10] sm:$0xf]
                %210 = vst [vmem:[%s204 + $0x8] sm:$0xf] %v209
                %v211 = vld [vmem:[%s203 + $0x18] sm:$0xf]
                %212 = vst [vmem:[%s204 + $0xc] sm:$0xf] %v211
                %v213 = vld [vmem:[%s203 + $0x20] sm:$0xf]
                %214 = vst [vmem:[%s204 + $0x10] sm:$0xf] %v213
                %v215 = vld [vmem:[%s203 + $0x28] sm:$0xf]
                %216 = vst [vmem:[%s204 + $0x14] sm:$0xf] %v215
                %v217 = vld [vmem:[%s203 + $0x30] sm:$0xf]
                %218 = vst [vmem:[%s204 + $0x18] sm:$0xf] %v217
                %v219 = vld [vmem:[%s203 + $0x38] sm:$0xf]
                %220 = vst [vmem:[%s204 + $0x1c] sm:$0xf] %v219
                %v221 = vld [vmem:[%s203 + $0x40] sm:$0xf]
                %222 = vst [vmem:[%s204 + $0x20] sm:$0xf] %v221
                %v223 = vld [vmem:[%s203 + $0x48] sm:$0xf]
                %224 = vst [vmem:[%s204 + $0x24] sm:$0xf] %v223
                %v225 = vld [vmem:[%s203 + $0x50] sm:$0xf]
                %226 = vst [vmem:[%s204 + $0x28] sm:$0xf] %v225
                %v227 = vld [vmem:[%s203 + $0x58] sm:$0xf]
                %228 = vst [vmem:[%s204 + $0x2c] sm:$0xf] %v227
                %v229 = vld [vmem:[%s203 + $0x60] sm:$0xf]
                %230 = vst [vmem:[%s204 + $0x30] sm:$0xf] %v229
                %v231 = vld [vmem:[%s203 + $0x68] sm:$0xf]
                %232 = vst [vmem:[%s204 + $0x34] sm:$0xf] %v231
                %v233 = vld [vmem:[%s203 + $0x70] sm:$0xf]
                %234 = vst [vmem:[%s204 + $0x38] sm:$0xf] %v233
                %v235 = vld [vmem:[%s203 + $0x78] sm:$0xf]
                %236 = vst [vmem:[%s204 + $0x3c] sm:$0xf] %v235
              $region49: #{gcn_forward.3} parent=43 // loop_footer
                %s202 = sadd.s32 1, %s198
              $region50: #{gcn_forward.3} parent=43 // loop_footer_branch
                %197 = sbr.rel target = $region46
              $region51: #{gcn_forward.3} parent=43 // loop_exit
                _
            $region44: #{gcn_forward.3} parent=35 // pred_fallthru
              _
          $region36: #{gcn_forward.3} parent=31 // pred_fallthru
            _
          %288 = vnop
        $region32: #{gcn_forward.3} parent=23 // pred_fallthru
          _
      $region24: #{gcn_forward.3} parent=5 // pred_fallthru
        _
      %p289 = scmp.le.s32.totalorder 1, %s10
      %p290 = scmp.lt.s32.totalorder %s10, 5
      %p291 = pnand %p289, %p290
      %p292 = pneg %p291
      // Predicated region
      $region70: #{gcn_forward.3} parent=5 // pred_check
        _
      $region71: #{gcn_forward.3} parent=5 // pred_check_branch
        %294 = sbr.rel (%p291) target = $region73
      $region72: #{gcn_forward.3} parent=5 // pred_region
        %s295 = ssub.s32 %s10, 1
        %s296 = sand.u32 %s63, 1
        %s297 = sand.u32 %s63, 1
        %s298 = smul.addr %s297, 64
        %s299 = scalar_lea.vmem [#allocation3], %s298
        // Predicated region
        $region74: #{gcn_forward.3} parent=72 // pred_check
          %p300 = pneg %p76
        $region75: #{gcn_forward.3} parent=72 // pred_check_branch
          %302 = sbr.rel (%p300) target = $region77
        $region76: #{gcn_forward.3} parent=72 // pred_region
          _
        $region77: #{gcn_forward.3} parent=72 // pred_fallthru
          _
        %s303 = smul.u32 16, %s20
        %p304 = scmp.lt.s32.totalorder %s303, 31
        %s305 = scalar_select %p304, %s303, 31
        %s306 = smul.addr %s305, 8
        %s307 = scalar_lea.vmem %s0, %s306
        %p308 = pneg %p48
        %p309 = pneg %p45
        %s310 = sand.u32 %s63, 1
        %s311 = sand.u32 %s63, 1
        %s312 = smul.addr %s311, 64
        %s313 = scalar_lea.vmem [#allocation3], %s312
        %p314 = pneg %p76
        %p315 = pneg %p73
        %p316 = pneg %p97
        %p317 = pneg %p94
        %p318 = pneg %p118
        %p319 = pneg %p115
        %p320 = pneg %p144
        %p321 = pneg %p141
        %s322 = smul.u32 16, %s19
        %p323 = scmp.lt.s32.totalorder %s322, 31
        %s324 = scalar_select %p323, %s322, 31
        %s325 = smul.addr %s324, 8
        %s326 = scalar_lea.vmem %s4, %s325
        %s327 = smul.u32 16, %s20
        %p328 = scmp.lt.s32.totalorder %s327, 31
        %s329 = scalar_select %p328, %s327, 31
        %s330 = smul.addr %s329, 8
        %s331 = scalar_lea.vmem %s0, %s330
        %s332 = smul.u32 16, %s20
        %s333 = smul.u32 16, %s19
        %s334 = smul.u32 16, %s19
        %p335 = scmp.lt.s32.totalorder %s334, 31
        %s336 = scalar_select %p335, %s334, 31
        %s337 = smul.addr %s336, 8
        %s338 = scalar_lea.vmem %s4, %s337
        %s339 = smul.u32 16, %s19
        %p341 = scmp.eq.s32.totalorder %s20, 0
        // Predicated region
        $region78: #{gcn_forward.3} parent=72 // pred_check
          %p342 = pneg %p341
        $region79: #{gcn_forward.3} parent=72 // pred_check_branch
          %344 = sbr.rel (%p342) target = $region81
        $region80: #{gcn_forward.3} parent=72 // pred_region
          %345 = vst [vmem:[#allocation2] sm:$0xff] 0.0
          %346 = vst [vmem:[#allocation2 + $0x8] sm:$0xff] 0.0
          %347 = vst [vmem:[#allocation2 + $0x10] sm:$0xff] 0.0
          %348 = vst [vmem:[#allocation2 + $0x18] sm:$0xff] 0.0
          %349 = vst [vmem:[#allocation2 + $0x20] sm:$0xff] 0.0
          %350 = vst [vmem:[#allocation2 + $0x28] sm:$0xff] 0.0
          %351 = vst [vmem:[#allocation2 + $0x30] sm:$0xff] 0.0
          %352 = vst [vmem:[#allocation2 + $0x38] sm:$0xff] 0.0
          %353 = vst [vmem:[#allocation2 + $0x40] sm:$0xff] 0.0
          %354 = vst [vmem:[#allocation2 + $0x48] sm:$0xff] 0.0
          %355 = vst [vmem:[#allocation2 + $0x50] sm:$0xff] 0.0
          %356 = vst [vmem:[#allocation2 + $0x58] sm:$0xff] 0.0
          %357 = vst [vmem:[#allocation2 + $0x60] sm:$0xff] 0.0
          %358 = vst [vmem:[#allocation2 + $0x68] sm:$0xff] 0.0
          %359 = vst [vmem:[#allocation2 + $0x70] sm:$0xff] 0.0
          %360 = vst [vmem:[#allocation2 + $0x78] sm:$0xff] 0.0
        $region81: #{gcn_forward.3} parent=72 // pred_fallthru
          _
        %v361 = vld [vmem:[%s331] sm:$0xff]
        %v362 = vld [vmem:[%s331 + $0x8] sm:$0xff]
        %v363 = vld [vmem:[%s331 + $0x10] sm:$0xff]
        %v364 = vld [vmem:[%s331 + $0x18] sm:$0xff]
        %v365 = vld [vmem:[%s331 + $0x20] sm:$0xff]
        %v366 = vld [vmem:[%s331 + $0x28] sm:$0xff]
        %v367 = vld [vmem:[%s331 + $0x30] sm:$0xff]
        %v368 = vld [vmem:[%s331 + $0x38] sm:$0xff]
        %v369 = vld [vmem:[%s331 + $0x40] sm:$0xff]
        %v370 = vld [vmem:[%s331 + $0x48] sm:$0xff]
        %v371 = vld [vmem:[%s331 + $0x50] sm:$0xff]
        %v372 = vld [vmem:[%s331 + $0x58] sm:$0xff]
        %v373 = vld [vmem:[%s331 + $0x60] sm:$0xff]
        %v374 = vld [vmem:[%s331 + $0x68] sm:$0xff]
        %v375 = vld [vmem:[%s331 + $0x70] sm:$0xff]
        %v376 = vld [vmem:[%s331 + $0x78] sm:$0xff]
        %v377 = vld [vmem:[%s2] sm:$0xff]
        %v378 = vld [vmem:[%s2 + $0x8] sm:$0xff]
        %v379 = vld [vmem:[%s2 + $0x10] sm:$0xff]
        %v380 = vld [vmem:[%s2 + $0x18] sm:$0xff]
        %v381 = vld [vmem:[%s2 + $0x20] sm:$0xff]
        %v382 = vld [vmem:[%s2 + $0x28] sm:$0xff]
        %v383 = vld [vmem:[%s2 + $0x30] sm:$0xff]
        %v384 = vld [vmem:[%s2 + $0x38] sm:$0xff]
        %v385 = vld [vmem:[%s2 + $0x40] sm:$0xff]
        %v386 = vld [vmem:[%s2 + $0x48] sm:$0xff]
        %v387 = vld [vmem:[%s2 + $0x50] sm:$0xff]
        %v388 = vld [vmem:[%s2 + $0x58] sm:$0xff]
        %v389 = vld [vmem:[%s2 + $0x60] sm:$0xff]
        %v390 = vld [vmem:[%s2 + $0x68] sm:$0xff]
        %v391 = vld [vmem:[%s2 + $0x70] sm:$0xff]
        %v392 = vld [vmem:[%s2 + $0x78] sm:$0xff]
        %393 = vmatprep.subr.mxu0 0.0
        %394 = vmatpush1.msra.mxu0 %v377
        %395 = vmatprep.subr.mxu0 0.0
        %396 = vmatpush1.msra.mxu0 %v378
        %397 = vmatprep.subr.mxu0 0.0
        %398 = vmatpush1.msra.mxu0 %v379
        %399 = vmatprep.subr.mxu0 0.0
        %400 = vmatpush1.msra.mxu0 %v380
        %401 = vmatprep.subr.mxu0 0.0
        %402 = vmatpush1.msra.mxu0 %v381
        %403 = vmatprep.subr.mxu0 0.0
        %404 = vmatpush1.msra.mxu0 %v382
        %405 = vmatprep.subr.mxu0 0.0
        %406 = vmatpush1.msra.mxu0 %v383
        %407 = vmatprep.subr.mxu0 0.0
        %408 = vmatpush1.msra.mxu0 %v384
        %409 = vmatprep.subr.mxu0 0.0
        %410 = vmatpush1.msra.mxu0 %v385
        %411 = vmatprep.subr.mxu0 0.0
        %412 = vmatpush1.msra.mxu0 %v386
        %413 = vmatprep.subr.mxu0 0.0
        %414 = vmatpush1.msra.mxu0 %v387
        %415 = vmatprep.subr.mxu0 0.0
        %416 = vmatpush1.msra.mxu0 %v388
        %417 = vmatprep.subr.mxu0 0.0
        %418 = vmatpush1.msra.mxu0 %v389
        %419 = vmatprep.subr.mxu0 0.0
        %420 = vmatpush1.msra.mxu0 %v390
        %421 = vmatprep.subr.mxu0 0.0
        %422 = vmatpush1.msra.mxu0 %v391
        %423 = vmatprep.subr.mxu0 0.0
        %424 = vmatpush1.msra.mxu0 %v392
        %425 = vmatprep.subr.mxu0 0.0
        %426 = vmatpush1.msra.mxu0 0.0
        %427 = vmatprep.subr.mxu0 0.0
        %428 = vmatpush1.msra.mxu0 0.0
        %429 = vmatprep.subr.mxu0 0.0
        %430 = vmatpush1.msra.mxu0 0.0
        %431 = vmatprep.subr.mxu0 0.0
        %432 = vmatpush1.msra.mxu0 0.0
        %433 = vmatprep.subr.mxu0 0.0
        %434 = vmatpush1.msra.mxu0 0.0
        %435 = vmatprep.subr.mxu0 0.0
        %436 = vmatpush1.msra.mxu0 0.0
        %437 = vmatprep.subr.mxu0 0.0
        %438 = vmatpush1.msra.mxu0 0.0
        %439 = vmatprep.subr.mxu0 0.0
        %440 = vmatpush1.msra.mxu0 0.0
        %441 = vmatprep.subr.mxu0 0.0
        %442 = vmatpush1.msra.mxu0 0.0
        %443 = vmatprep.subr.mxu0 0.0
        %444 = vmatpush1.msra.mxu0 0.0
        %445 = vmatprep.subr.mxu0 0.0
        %446 = vmatpush1.msra.mxu0 0.0
        %447 = vmatprep.subr.mxu0 0.0
        %448 = vmatpush1.msra.mxu0 0.0
        %449 = vmatprep.subr.mxu0 0.0
        %450 = vmatpush1.msra.mxu0 0.0
        %451 = vmatprep.subr.mxu0 0.0
        %452 = vmatpush1.msra.mxu0 0.0
        %453 = vmatprep.subr.mxu0 0.0
        %454 = vmatpush1.msra.mxu0 0.0
        %455 = vmatprep.subr.mxu0 0.0
        %456 = vmatpush1.msra.mxu0 0.0
        %457 = vmatprep.mubr.f32.mxu0 0.0
        %458 = vmatmul.mubr.f32.gmra.mrb[0].mxu0 %v361
        %v459 = vpop.f32.mrb[0].mxu0
        %v460 = vadd.f32 0.0, %v459
        %v461 = vpop.f32.mrb[0].mxu0
        %462 = vmatprep.mubr.f32.mxu0 0.0
        %463 = vmatmul.mubr.f32.gmra.mrb[0].mxu0 %v362
        %v464 = vpop.f32.mrb[0].mxu0
        %v465 = vadd.f32 0.0, %v464
        %v466 = vpop.f32.mrb[0].mxu0
        %467 = vmatprep.mubr.f32.mxu0 0.0
        %468 = vmatmul.mubr.f32.gmra.mrb[0].mxu0 %v363
        %v469 = vpop.f32.mrb[0].mxu0
        %v470 = vadd.f32 0.0, %v469
        %v471 = vpop.f32.mrb[0].mxu0
        %472 = vmatprep.mubr.f32.mxu0 0.0
        %473 = vmatmul.mubr.f32.gmra.mrb[0].mxu0 %v364
        %v474 = vpop.f32.mrb[0].mxu0
        %v475 = vadd.f32 0.0, %v474
        %v476 = vpop.f32.mrb[0].mxu0
        %477 = vmatprep.mubr.f32.mxu0 0.0
        %478 = vmatmul.mubr.f32.gmra.mrb[0].mxu0 %v365
        %v479 = vpop.f32.mrb[0].mxu0
        %v480 = vadd.f32 0.0, %v479
        %v481 = vpop.f32.mrb[0].mxu0
        %482 = vmatprep.mubr.f32.mxu0 0.0
        %483 = vmatmul.mubr.f32.gmra.mrb[0].mxu0 %v366
        %v484 = vpop.f32.mrb[0].mxu0
        %v485 = vadd.f32 0.0, %v484
        %v486 = vpop.f32.mrb[0].mxu0
        %487 = vmatprep.mubr.f32.mxu0 0.0
        %488 = vmatmul.mubr.f32.gmra.mrb[0].mxu0 %v367
        %v489 = vpop.f32.mrb[0].mxu0
        %v490 = vadd.f32 0.0, %v489
        %v491 = vpop.f32.mrb[0].mxu0
        %492 = vmatprep.mubr.f32.mxu0 0.0
        %493 = vmatmul.mubr.f32.gmra.mrb[0].mxu0 %v368
        %v494 = vpop.f32.mrb[0].mxu0
        %v495 = vadd.f32 0.0, %v494
        %v496 = vpop.f32.mrb[0].mxu0
        %497 = vmatprep.mubr.f32.mxu0 0.0
        %498 = vmatmul.mubr.f32.gmra.mrb[0].mxu0 %v369
        %v499 = vpop.f32.mrb[0].mxu0
        %v500 = vadd.f32 0.0, %v499
        %v501 = vpop.f32.mrb[0].mxu0
        %502 = vmatprep.mubr.f32.mxu0 0.0
        %503 = vmatmul.mubr.f32.gmra.mrb[0].mxu0 %v370
        %v504 = vpop.f32.mrb[0].mxu0
        %v505 = vadd.f32 0.0, %v504
        %v506 = vpop.f32.mrb[0].mxu0
        %507 = vmatprep.mubr.f32.mxu0 0.0
        %508 = vmatmul.mubr.f32.gmra.mrb[0].mxu0 %v371
        %v509 = vpop.f32.mrb[0].mxu0
        %v510 = vadd.f32 0.0, %v509
        %v511 = vpop.f32.mrb[0].mxu0
        %512 = vmatprep.mubr.f32.mxu0 0.0
        %513 = vmatmul.mubr.f32.gmra.mrb[0].mxu0 %v372
        %v514 = vpop.f32.mrb[0].mxu0
        %v515 = vadd.f32 0.0, %v514
        %v516 = vpop.f32.mrb[0].mxu0
        %517 = vmatprep.mubr.f32.mxu0 0.0
        %518 = vmatmul.mubr.f32.gmra.mrb[0].mxu0 %v373
        %v519 = vpop.f32.mrb[0].mxu0
        %v520 = vadd.f32 0.0, %v519
        %v521 = vpop.f32.mrb[0].mxu0
        %522 = vmatprep.mubr.f32.mxu0 0.0
        %523 = vmatmul.mubr.f32.gmra.mrb[0].mxu0 %v374
        %v524 = vpop.f32.mrb[0].mxu0
        %v525 = vadd.f32 0.0, %v524
        %v526 = vpop.f32.mrb[0].mxu0
        %527 = vmatprep.mubr.f32.mxu0 0.0
        %528 = vmatmul.mubr.f32.gmra.mrb[0].mxu0 %v375
        %v529 = vpop.f32.mrb[0].mxu0
        %v530 = vadd.f32 0.0, %v529
        %v531 = vpop.f32.mrb[0].mxu0
        %532 = vmatprep.mubr.f32.mxu0 0.0
        %533 = vmatmul.mubr.f32.gmra.mrb[0].mxu0 %v376
        %v534 = vpop.f32.mrb[0].mxu0
        %v535 = vadd.f32 0.0, %v534
        %v536 = vpop.f32.mrb[0].mxu0
        %537 = vdwg.mxu0
        %v538 = vld [vmem:[#allocation2] sm:$0xff]
        %v539 = vld [vmem:[#allocation2 + $0x8] sm:$0xff]
        %v540 = vld [vmem:[#allocation2 + $0x10] sm:$0xff]
        %v541 = vld [vmem:[#allocation2 + $0x18] sm:$0xff]
        %v542 = vld [vmem:[#allocation2 + $0x20] sm:$0xff]
        %v543 = vld [vmem:[#allocation2 + $0x28] sm:$0xff]
        %v544 = vld [vmem:[#allocation2 + $0x30] sm:$0xff]
        %v545 = vld [vmem:[#allocation2 + $0x38] sm:$0xff]
        %v546 = vld [vmem:[#allocation2 + $0x40] sm:$0xff]
        %v547 = vld [vmem:[#allocation2 + $0x48] sm:$0xff]
        %v548 = vld [vmem:[#allocation2 + $0x50] sm:$0xff]
        %v549 = vld [vmem:[#allocation2 + $0x58] sm:$0xff]
        %v550 = vld [vmem:[#allocation2 + $0x60] sm:$0xff]
        %v551 = vld [vmem:[#allocation2 + $0x68] sm:$0xff]
        %v552 = vld [vmem:[#allocation2 + $0x70] sm:$0xff]
        %v553 = vld [vmem:[#allocation2 + $0x78] sm:$0xff]
        %v554 = vld [vmem:[%s299] sm:$0xf]
        %v555 = vld [vmem:[%s299 + $0x4] sm:$0xf]
        %v556 = vld [vmem:[%s299 + $0x8] sm:$0xf]
        %v557 = vld [vmem:[%s299 + $0xc] sm:$0xf]
        %v558 = vld [vmem:[%s299 + $0x10] sm:$0xf]
        %v559 = vld [vmem:[%s299 + $0x14] sm:$0xf]
        %v560 = vld [vmem:[%s299 + $0x18] sm:$0xf]
        %v561 = vld [vmem:[%s299 + $0x1c] sm:$0xf]
        %v562 = vld [vmem:[%s299 + $0x20] sm:$0xf]
        %v563 = vld [vmem:[%s299 + $0x24] sm:$0xf]
        %v564 = vld [vmem:[%s299 + $0x28] sm:$0xf]
        %v565 = vld [vmem:[%s299 + $0x2c] sm:$0xf]
        %v566 = vld [vmem:[%s299 + $0x30] sm:$0xf]
        %v567 = vld [vmem:[%s299 + $0x34] sm:$0xf]
        %v568 = vld [vmem:[%s299 + $0x38] sm:$0xf]
        %v569 = vld [vmem:[%s299 + $0x3c] sm:$0xf]
        %v570 = vpack.c.bf16 %v465, %v460
        %v571 = vpack.c.bf16 %v475, %v470
        %v572 = vpack.c.bf16 %v485, %v480
        %v573 = vpack.c.bf16 %v495, %v490
        %v574 = vpack.c.bf16 %v505, %v500
        %v575 = vpack.c.bf16 %v515, %v510
        %v576 = vpack.c.bf16 %v525, %v520
        %v577 = vpack.c.bf16 %v535, %v530
        %v594 = vunpack.c.l.b16 %v554
        %v595 = vunpack.c.l.b16 %v555
        %v596 = vunpack.c.l.b16 %v556
        %v597 = vunpack.c.l.b16 %v557
        %v598 = vunpack.c.l.b16 %v558
        %v599 = vunpack.c.l.b16 %v559
        %v600 = vunpack.c.l.b16 %v560
        %v601 = vunpack.c.l.b16 %v561
        %v602 = vunpack.c.l.b16 %v562
        %v603 = vunpack.c.l.b16 %v563
        %v604 = vunpack.c.l.b16 %v564
        %v605 = vunpack.c.l.b16 %v565
        %v606 = vunpack.c.l.b16 %v566
        %v607 = vunpack.c.l.b16 %v567
        %v608 = vunpack.c.l.b16 %v568
        %v609 = vunpack.c.l.b16 %v569
        %v610 = vpack.c.b16 %v595, %v594
        %v611 = vpack.c.b16 %v597, %v596
        %v612 = vpack.c.b16 %v599, %v598
        %v613 = vpack.c.b16 %v601, %v600
        %v614 = vpack.c.b16 %v603, %v602
        %v615 = vpack.c.b16 %v605, %v604
        %v616 = vpack.c.b16 %v607, %v606
        %v617 = vpack.c.b16 %v609, %v608
        %626 = vmatprep.subr.bf16.mxu0 0
        %627 = vmatpush1.bf16.msra.mxu0 %v570
        %628 = vmatprep.subr.bf16.mxu0 0
        %629 = vmatpush1.bf16.msra.mxu0 %v571
        %630 = vmatprep.subr.bf16.mxu0 0
        %631 = vmatpush1.bf16.msra.mxu0 %v572
        %632 = vmatprep.subr.bf16.mxu0 0
        %633 = vmatpush1.bf16.msra.mxu0 %v573
        %634 = vmatprep.subr.bf16.mxu0 0
        %635 = vmatpush1.bf16.msra.mxu0 %v574
        %636 = vmatprep.subr.bf16.mxu0 0
        %637 = vmatpush1.bf16.msra.mxu0 %v575
        %638 = vmatprep.subr.bf16.mxu0 0
        %639 = vmatpush1.bf16.msra.mxu0 %v576
        %640 = vmatprep.subr.bf16.mxu0 0
        %641 = vmatpush1.bf16.msra.mxu0 %v577
        %642 = vmatprep.subr.bf16.mxu0 0
        %643 = vmatpush1.bf16.msra.mxu0 0
        %644 = vmatprep.subr.bf16.mxu0 0
        %645 = vmatpush1.bf16.msra.mxu0 0
        %646 = vmatprep.subr.bf16.mxu0 0
        %647 = vmatpush1.bf16.msra.mxu0 0
        %648 = vmatprep.subr.bf16.mxu0 0
        %649 = vmatpush1.bf16.msra.mxu0 0
        %650 = vmatprep.subr.bf16.mxu0 0
        %651 = vmatpush1.bf16.msra.mxu0 0
        %652 = vmatprep.subr.bf16.mxu0 0
        %653 = vmatpush1.bf16.msra.mxu0 0
        %654 = vmatprep.subr.bf16.mxu0 0
        %655 = vmatpush1.bf16.msra.mxu0 0
        %656 = vmatprep.subr.bf16.mxu0 0
        %657 = vmatpush1.bf16.msra.mxu0 0
        %658 = vmatprep.mubr.bf16.mxu0 0
        %659 = vmatmul.mubr.bf16.gmra.mrb[0].mxu0 %v610
        %v660 = vpop.f32.mrb[0].mxu0
        %v661 = vadd.f32 0.0, %v660
        %v662 = vpop.f32.mrb[0].mxu0
        %v663 = vpop.f32.mrb[0].mxu0
        %v664 = vadd.f32 0.0, %v663
        %v665 = vpop.f32.mrb[0].mxu0
        %666 = vmatprep.mubr.bf16.mxu0 0
        %667 = vmatmul.mubr.bf16.gmra.mrb[0].mxu0 %v611
        %v668 = vpop.f32.mrb[0].mxu0
        %v669 = vadd.f32 0.0, %v668
        %v670 = vpop.f32.mrb[0].mxu0
        %v671 = vpop.f32.mrb[0].mxu0
        %v672 = vadd.f32 0.0, %v671
        %v673 = vpop.f32.mrb[0].mxu0
        %674 = vmatprep.mubr.bf16.mxu0 0
        %675 = vmatmul.mubr.bf16.gmra.mrb[0].mxu0 %v612
        %v676 = vpop.f32.mrb[0].mxu0
        %v677 = vadd.f32 0.0, %v676
        %v678 = vpop.f32.mrb[0].mxu0
        %v679 = vpop.f32.mrb[0].mxu0
        %v680 = vadd.f32 0.0, %v679
        %v681 = vpop.f32.mrb[0].mxu0
        %682 = vmatprep.mubr.bf16.mxu0 0
        %683 = vmatmul.mubr.bf16.gmra.mrb[0].mxu0 %v613
        %v684 = vpop.f32.mrb[0].mxu0
        %v685 = vadd.f32 0.0, %v684
        %v686 = vpop.f32.mrb[0].mxu0
        %v687 = vpop.f32.mrb[0].mxu0
        %v688 = vadd.f32 0.0, %v687
        %v689 = vpop.f32.mrb[0].mxu0
        %690 = vmatprep.mubr.bf16.mxu0 0
        %691 = vmatmul.mubr.bf16.gmra.mrb[0].mxu0 %v614
        %v692 = vpop.f32.mrb[0].mxu0
        %v693 = vadd.f32 0.0, %v692
        %v694 = vpop.f32.mrb[0].mxu0
        %v695 = vpop.f32.mrb[0].mxu0
        %v696 = vadd.f32 0.0, %v695
        %v697 = vpop.f32.mrb[0].mxu0
        %698 = vmatprep.mubr.bf16.mxu0 0
        %699 = vmatmul.mubr.bf16.gmra.mrb[0].mxu0 %v615
        %v700 = vpop.f32.mrb[0].mxu0
        %v701 = vadd.f32 0.0, %v700
        %v702 = vpop.f32.mrb[0].mxu0
        %v703 = vpop.f32.mrb[0].mxu0
        %v704 = vadd.f32 0.0, %v703
        %v705 = vpop.f32.mrb[0].mxu0
        %706 = vmatprep.mubr.bf16.mxu0 0
        %707 = vmatmul.mubr.bf16.gmra.mrb[0].mxu0 %v616
        %v708 = vpop.f32.mrb[0].mxu0
        %v709 = vadd.f32 0.0, %v708
        %v710 = vpop.f32.mrb[0].mxu0
        %v711 = vpop.f32.mrb[0].mxu0
        %v712 = vadd.f32 0.0, %v711
        %v713 = vpop.f32.mrb[0].mxu0
        %714 = vmatprep.mubr.bf16.mxu0 0
        %715 = vmatmul.mubr.bf16.gmra.mrb[0].mxu0 %v617
        %v716 = vpop.f32.mrb[0].mxu0
        %v717 = vadd.f32 0.0, %v716
        %v718 = vpop.f32.mrb[0].mxu0
        %v719 = vpop.f32.mrb[0].mxu0
        %v720 = vadd.f32 0.0, %v719
        %v721 = vpop.f32.mrb[0].mxu0
        %722 = vdwg.mxu0
        %v723 = vadd.f32 %v538, %v661
        %v724 = vadd.f32 %v539, %v664
        %v725 = vadd.f32 %v540, %v669
        %v726 = vadd.f32 %v541, %v672
        %v727 = vadd.f32 %v542, %v677
        %v728 = vadd.f32 %v543, %v680
        %v729 = vadd.f32 %v544, %v685
        %v730 = vadd.f32 %v545, %v688
        %v731 = vadd.f32 %v546, %v693
        %v732 = vadd.f32 %v547, %v696
        %v733 = vadd.f32 %v548, %v701
        %v734 = vadd.f32 %v549, %v704
        %v735 = vadd.f32 %v550, %v709
        %v736 = vadd.f32 %v551, %v712
        %v737 = vadd.f32 %v552, %v717
        %v738 = vadd.f32 %v553, %v720
        %739 = vst [vmem:[#allocation2] sm:$0xff] %v723
        %740 = vst [vmem:[#allocation2 + $0x8] sm:$0xff] %v724
        %741 = vst [vmem:[#allocation2 + $0x10] sm:$0xff] %v725
        %742 = vst [vmem:[#allocation2 + $0x18] sm:$0xff] %v726
        %743 = vst [vmem:[#allocation2 + $0x20] sm:$0xff] %v727
        %744 = vst [vmem:[#allocation2 + $0x28] sm:$0xff] %v728
        %745 = vst [vmem:[#allocation2 + $0x30] sm:$0xff] %v729
        %746 = vst [vmem:[#allocation2 + $0x38] sm:$0xff] %v730
        %747 = vst [vmem:[#allocation2 + $0x40] sm:$0xff] %v731
        %748 = vst [vmem:[#allocation2 + $0x48] sm:$0xff] %v732
        %749 = vst [vmem:[#allocation2 + $0x50] sm:$0xff] %v733
        %750 = vst [vmem:[#allocation2 + $0x58] sm:$0xff] %v734
        %751 = vst [vmem:[#allocation2 + $0x60] sm:$0xff] %v735
        %752 = vst [vmem:[#allocation2 + $0x68] sm:$0xff] %v736
        %753 = vst [vmem:[#allocation2 + $0x70] sm:$0xff] %v737
        %754 = vst [vmem:[#allocation2 + $0x78] sm:$0xff] %v738
        %p755 = scmp.eq.s32.totalorder %s20, 1
        // Predicated region
        $region82: #{gcn_forward.3} parent=72 // pred_check
          %p756 = pneg %p755
        $region83: #{gcn_forward.3} parent=72 // pred_check_branch
          %758 = sbr.rel (%p756) target = $region85
        $region84: #{gcn_forward.3} parent=72 // pred_region
          %v759 = vld [vmem:[#allocation2] sm:$0xff]
          %v760 = vld [vmem:[#allocation2 + $0x8] sm:$0xff]
          %v761 = vld [vmem:[#allocation2 + $0x10] sm:$0xff]
          %v762 = vld [vmem:[#allocation2 + $0x18] sm:$0xff]
          %v763 = vld [vmem:[#allocation2 + $0x20] sm:$0xff]
          %v764 = vld [vmem:[#allocation2 + $0x28] sm:$0xff]
          %v765 = vld [vmem:[#allocation2 + $0x30] sm:$0xff]
          %v766 = vld [vmem:[#allocation2 + $0x38] sm:$0xff]
          %v767 = vld [vmem:[#allocation2 + $0x40] sm:$0xff]
          %v768 = vld [vmem:[#allocation2 + $0x48] sm:$0xff]
          %v769 = vld [vmem:[#allocation2 + $0x50] sm:$0xff]
          %v770 = vld [vmem:[#allocation2 + $0x58] sm:$0xff]
          %v771 = vld [vmem:[#allocation2 + $0x60] sm:$0xff]
          %v772 = vld [vmem:[#allocation2 + $0x68] sm:$0xff]
          %v773 = vld [vmem:[#allocation2 + $0x70] sm:$0xff]
          %v774 = vld [vmem:[#allocation2 + $0x78] sm:$0xff]
          %v775 = vld [vmem:[%s3] sm:$0x1]
          %v777 = vlaneseq
          %v778 = vshrl.u32 %v777, 7
          %v779 = vsub.s32 0, %v778
          %v780 = vrot.slane %v775, %v779
          %v782 = vadd.f32 %v759, %v780
          %v783 = vadd.f32 %v760, %v780
          %v784 = vadd.f32 %v761, %v780
          %v785 = vadd.f32 %v762, %v780
          %v786 = vadd.f32 %v763, %v780
          %v787 = vadd.f32 %v764, %v780
          %v788 = vadd.f32 %v765, %v780
          %v789 = vadd.f32 %v766, %v780
          %v790 = vadd.f32 %v767, %v780
          %v791 = vadd.f32 %v768, %v780
          %v792 = vadd.f32 %v769, %v780
          %v793 = vadd.f32 %v770, %v780
          %v794 = vadd.f32 %v771, %v780
          %v795 = vadd.f32 %v772, %v780
          %v796 = vadd.f32 %v773, %v780
          %v797 = vadd.f32 %v774, %v780
          %v798 = vlaneseq
          %v799 = vand.u32 %v798, 127
          %vm800 = vcmp.lt.s32.totalorder %v799, 16
          %v801 = vsel %vm800, %v782, -1e+30
          %v802 = vsel %vm800, %v783, -1e+30
          %v803 = vsel %vm800, %v784, -1e+30
          %v804 = vsel %vm800, %v785, -1e+30
          %v805 = vsel %vm800, %v786, -1e+30
          %v806 = vsel %vm800, %v787, -1e+30
          %v807 = vsel %vm800, %v788, -1e+30
          %v808 = vsel %vm800, %v789, -1e+30
          %v809 = vsel %vm800, %v790, -1e+30
          %v810 = vsel %vm800, %v791, -1e+30
          %v811 = vsel %vm800, %v792, -1e+30
          %v812 = vsel %vm800, %v793, -1e+30
          %v813 = vsel %vm800, %v794, -1e+30
          %v814 = vsel %vm800, %v795, -1e+30
          %v815 = vsel %vm800, %v796, -1e+30
          %v816 = vsel %vm800, %v797, -1e+30
          %817 = vmax.xlane.f32.xlu0 %v801
          %v818 = vpop.xlane.xlu0 %817
          %819 = vmax.xlane.f32.xlu0 %v802
          %v820 = vpop.xlane.xlu0 %819
          %821 = vmax.xlane.f32.xlu0 %v803
          %v822 = vpop.xlane.xlu0 %821
          %823 = vmax.xlane.f32.xlu0 %v804
          %v824 = vpop.xlane.xlu0 %823
          %825 = vmax.xlane.f32.xlu0 %v805
          %v826 = vpop.xlane.xlu0 %825
          %827 = vmax.xlane.f32.xlu0 %v806
          %v828 = vpop.xlane.xlu0 %827
          %829 = vmax.xlane.f32.xlu0 %v807
          %v830 = vpop.xlane.xlu0 %829
          %831 = vmax.xlane.f32.xlu0 %v808
          %v832 = vpop.xlane.xlu0 %831
          %833 = vmax.xlane.f32.xlu0 %v809
          %v834 = vpop.xlane.xlu0 %833
          %835 = vmax.xlane.f32.xlu0 %v810
          %v836 = vpop.xlane.xlu0 %835
          %837 = vmax.xlane.f32.xlu0 %v811
          %v838 = vpop.xlane.xlu0 %837
          %839 = vmax.xlane.f32.xlu0 %v812
          %v840 = vpop.xlane.xlu0 %839
          %841 = vmax.xlane.f32.xlu0 %v813
          %v842 = vpop.xlane.xlu0 %841
          %843 = vmax.xlane.f32.xlu0 %v814
          %v844 = vpop.xlane.xlu0 %843
          %845 = vmax.xlane.f32.xlu0 %v815
          %v846 = vpop.xlane.xlu0 %845
          %847 = vmax.xlane.f32.xlu0 %v816
          %v848 = vpop.xlane.xlu0 %847
          %v849 = vsub.f32 %v801, %v818
          %v850 = vsub.f32 %v802, %v820
          %v851 = vsub.f32 %v803, %v822
          %v852 = vsub.f32 %v804, %v824
          %v853 = vsub.f32 %v805, %v826
          %v854 = vsub.f32 %v806, %v828
          %v855 = vsub.f32 %v807, %v830
          %v856 = vsub.f32 %v808, %v832
          %v857 = vsub.f32 %v809, %v834
          %v858 = vsub.f32 %v810, %v836
          %v859 = vsub.f32 %v811, %v838
          %v860 = vsub.f32 %v812, %v840
          %v861 = vsub.f32 %v813, %v842
          %v862 = vsub.f32 %v814, %v844
          %v863 = vsub.f32 %v815, %v846
          %v864 = vsub.f32 %v816, %v848
          %v865 = vmul.f32 %v849, 1.442695
          %v866 = vpow.pop %v865
          %v867 = vmul.f32 %v850, 1.442695
          %v868 = vpow.pop %v867
          %v869 = vmul.f32 %v851, 1.442695
          %v870 = vpow.pop %v869
          %v871 = vmul.f32 %v852, 1.442695
          %v872 = vpow.pop %v871
          %v873 = vmul.f32 %v853, 1.442695
          %v874 = vpow.pop %v873
          %v875 = vmul.f32 %v854, 1.442695
          %v876 = vpow.pop %v875
          %v877 = vmul.f32 %v855, 1.442695
          %v878 = vpow.pop %v877
          %v879 = vmul.f32 %v856, 1.442695
          %v880 = vpow.pop %v879
          %v881 = vmul.f32 %v857, 1.442695
          %v882 = vpow.pop %v881
          %v883 = vmul.f32 %v858, 1.442695
          %v884 = vpow.pop %v883
          %v885 = vmul.f32 %v859, 1.442695
          %v886 = vpow.pop %v885
          %v887 = vmul.f32 %v860, 1.442695
          %v888 = vpow.pop %v887
          %v889 = vmul.f32 %v861, 1.442695
          %v890 = vpow.pop %v889
          %v891 = vmul.f32 %v862, 1.442695
          %v892 = vpow.pop %v891
          %v893 = vmul.f32 %v863, 1.442695
          %v894 = vpow.pop %v893
          %v895 = vmul.f32 %v864, 1.442695
          %v896 = vpow.pop %v895
          %897 = vadd.xlane.f32.xlu0 %v866
          %v898 = vpop.xlane.xlu0 %897
          %899 = vadd.xlane.f32.xlu0 %v868
          %v900 = vpop.xlane.xlu0 %899
          %901 = vadd.xlane.f32.xlu0 %v870
          %v902 = vpop.xlane.xlu0 %901
          %903 = vadd.xlane.f32.xlu0 %v872
          %v904 = vpop.xlane.xlu0 %903
          %905 = vadd.xlane.f32.xlu0 %v874
          %v906 = vpop.xlane.xlu0 %905
          %907 = vadd.xlane.f32.xlu0 %v876
          %v908 = vpop.xlane.xlu0 %907
          %909 = vadd.xlane.f32.xlu0 %v878
          %v910 = vpop.xlane.xlu0 %909
          %911 = vadd.xlane.f32.xlu0 %v880
          %v912 = vpop.xlane.xlu0 %911
          %913 = vadd.xlane.f32.xlu0 %v882
          %v914 = vpop.xlane.xlu0 %913
          %915 = vadd.xlane.f32.xlu0 %v884
          %v916 = vpop.xlane.xlu0 %915
          %917 = vadd.xlane.f32.xlu0 %v886
          %v918 = vpop.xlane.xlu0 %917
          %919 = vadd.xlane.f32.xlu0 %v888
          %v920 = vpop.xlane.xlu0 %919
          %921 = vadd.xlane.f32.xlu0 %v890
          %v922 = vpop.xlane.xlu0 %921
          %923 = vadd.xlane.f32.xlu0 %v892
          %v924 = vpop.xlane.xlu0 %923
          %925 = vadd.xlane.f32.xlu0 %v894
          %v926 = vpop.xlane.xlu0 %925
          %927 = vadd.xlane.f32.xlu0 %v896
          %v928 = vpop.xlane.xlu0 %927
          %v929 = vlog2.pop %v898
          %v930 = vmul.f32 %v929, 0.6931472
          %v931 = vlog2.pop %v900
          %v932 = vmul.f32 %v931, 0.6931472
          %v933 = vlog2.pop %v902
          %v934 = vmul.f32 %v933, 0.6931472
          %v935 = vlog2.pop %v904
          %v936 = vmul.f32 %v935, 0.6931472
          %v937 = vlog2.pop %v906
          %v938 = vmul.f32 %v937, 0.6931472
          %v939 = vlog2.pop %v908
          %v940 = vmul.f32 %v939, 0.6931472
          %v941 = vlog2.pop %v910
          %v942 = vmul.f32 %v941, 0.6931472
          %v943 = vlog2.pop %v912
          %v944 = vmul.f32 %v943, 0.6931472
          %v945 = vlog2.pop %v914
          %v946 = vmul.f32 %v945, 0.6931472
          %v947 = vlog2.pop %v916
          %v948 = vmul.f32 %v947, 0.6931472
          %v949 = vlog2.pop %v918
          %v950 = vmul.f32 %v949, 0.6931472
          %v951 = vlog2.pop %v920
          %v952 = vmul.f32 %v951, 0.6931472
          %v953 = vlog2.pop %v922
          %v954 = vmul.f32 %v953, 0.6931472
          %v955 = vlog2.pop %v924
          %v956 = vmul.f32 %v955, 0.6931472
          %v957 = vlog2.pop %v926
          %v958 = vmul.f32 %v957, 0.6931472
          %v959 = vlog2.pop %v928
          %v960 = vmul.f32 %v959, 0.6931472
          %v961 = vsub.f32 %v849, %v930
          %v962 = vsub.f32 %v850, %v932
          %v963 = vsub.f32 %v851, %v934
          %v964 = vsub.f32 %v852, %v936
          %v965 = vsub.f32 %v853, %v938
          %v966 = vsub.f32 %v854, %v940
          %v967 = vsub.f32 %v855, %v942
          %v968 = vsub.f32 %v856, %v944
          %v969 = vsub.f32 %v857, %v946
          %v970 = vsub.f32 %v858, %v948
          %v971 = vsub.f32 %v859, %v950
          %v972 = vsub.f32 %v860, %v952
          %v973 = vsub.f32 %v861, %v954
          %v974 = vsub.f32 %v862, %v956
          %v975 = vsub.f32 %v863, %v958
          %v976 = vsub.f32 %v864, %v960
          %977 = vst [vmem:[%s338] sm:$0xff] %v961
          %978 = vst [vmem:[%s338 + $0x8] sm:$0xff] %v962
          %979 = vst [vmem:[%s338 + $0x10] sm:$0xff] %v963
          %980 = vst [vmem:[%s338 + $0x18] sm:$0xff] %v964
          %981 = vst [vmem:[%s338 + $0x20] sm:$0xff] %v965
          %982 = vst [vmem:[%s338 + $0x28] sm:$0xff] %v966
          %983 = vst [vmem:[%s338 + $0x30] sm:$0xff] %v967
          %984 = vst [vmem:[%s338 + $0x38] sm:$0xff] %v968
          %985 = vst [vmem:[%s338 + $0x40] sm:$0xff] %v969
          %986 = vst [vmem:[%s338 + $0x48] sm:$0xff] %v970
          %987 = vst [vmem:[%s338 + $0x50] sm:$0xff] %v971
          %988 = vst [vmem:[%s338 + $0x58] sm:$0xff] %v972
          %989 = vst [vmem:[%s338 + $0x60] sm:$0xff] %v973
          %990 = vst [vmem:[%s338 + $0x68] sm:$0xff] %v974
          %991 = vst [vmem:[%s338 + $0x70] sm:$0xff] %v975
          %992 = vst [vmem:[%s338 + $0x78] sm:$0xff] %v976
        $region85: #{gcn_forward.3} parent=72 // pred_fallthru
          _
        %s993 = smul.u32 16, %s19
        %p994 = scmp.lt.s32.totalorder %s993, 31
        %s995 = scalar_select %p994, %s993, 31
        %s996 = smul.addr %s995, 8
        %s997 = scalar_lea.vmem %s4, %s996
        // Predicated region
        $region86: #{gcn_forward.3} parent=72 // pred_check
          %p998 = pneg %p141
        $region87: #{gcn_forward.3} parent=72 // pred_check_branch
          %1000 = sbr.rel (%p998) target = $region89
        $region88: #{gcn_forward.3} parent=72 // pred_region
          %s1001 = smul.u32 16, %s19
        $region89: #{gcn_forward.3} parent=72 // pred_fallthru
          _
      $region73: #{gcn_forward.3} parent=5 // pred_fallthru
        _
      %p1002 = scmp.le.s32.totalorder 2, %s10
      // Predicated region
      $region90: #{gcn_forward.3} parent=5 // pred_check
        %p1003 = pneg %p1002
      $region91: #{gcn_forward.3} parent=5 // pred_check_branch
        %1005 = sbr.rel (%p1003) target = $region93
      $region92: #{gcn_forward.3} parent=5 // pred_region
        %s1006 = ssub.s32 %s10, 2
        // Predicated region
        $region94: #{gcn_forward.3} parent=92 // pred_check
          %p1007 = pneg %p147
        $region95: #{gcn_forward.3} parent=92 // pred_check_branch
          %1009 = sbr.rel (%p1007) target = $region97
        $region96: #{gcn_forward.3} parent=92 // pred_region
          %s1010 = smul.u32 16, %s21
          %p1011 = scmp.lt.s32.totalorder %s1010, 31
          %s1012 = scalar_select %p1011, %s1010, 31
          %s1013 = smul.addr %s1012, 8
          %s1014 = scalar_lea.vmem %s4, %s1013
        $region97: #{gcn_forward.3} parent=92 // pred_fallthru
          _
      $region93: #{gcn_forward.3} parent=5 // pred_fallthru
        _
    $region6: #{gcn_forward.3} parent=1 // loop_footer
      %s14 = sadd.s32 1, %s10
    $region7: #{gcn_forward.3} parent=1 // loop_footer_branch
      %9 = sbr.rel target = $region3
    $region8: #{gcn_forward.3} parent=1 // loop_exit
      _

// kernel: gcn_forward.2
$region0: #{gcn_forward.2}
  #allocation0 [shape = 'u32[]', space=smem, size = 0x4, offset = 0x4, fixed_abs, tag = 'smem constant byte address 0x4 - core index']
  #allocation1 [shape = 'u32[144,128]{1,0:T(1,128)}', space=vmem, size = 0x12000, scoped, tag = 'internal scratch']
  #allocation2 [shape = 'f32[128,128]{1,0:T(8,128)}', space=vmem, size = 0x10000, scoped, tag = 'scratch operand']
  %s0 = inlined_call_operand.vmem [shape: f32[256,128], index: 0, kind: input, shape index: {}]
  %s1 = inlined_call_operand.vmem [shape: bf16[256,256], index: 1, kind: input, shape index: {}]
  %s2 = inlined_call_operand.vmem [shape: f32[128,128], index: 2, kind: input, shape index: {}]
  %s3 = inlined_call_operand.vmem [shape: f32[1,128], index: 3, kind: input, shape index: {}]
  %s4 = inlined_call_operand.vmem [shape: f32[256,128], index: 4, kind: input, shape index: {}]
  %s5 = inlined_call_operand.vmem [shape: f32[256,128], index: 5, kind: output, shape index: {}]
  %s6 = sld [smem:[#allocation0]]
  $region102: #{gcn_forward.2} parent=0
    _
  %s8 = ssub.s32 1, %s6
  %s9 = scalar_select 0, %s8, %s6
  $region1: #{gcn_forward.2} parent=0
    #allocation3 [shape = 'u8[65536]{0}', space=vmem, size = 0x10000, scoped, tag = 'input window, operand 1']
    loop: start=0, step=1, limit=6
    $region2: #{gcn_forward.2} parent=1 // loop_pre_header
      _
    $region3: #{gcn_forward.2} parent=1 // loop_header
      %s11 = sphi 0, %s15
      %p12 = scmp.ge.s32.totalorder %s11, 6
      %s18 = sphi 0, %s30
      %s19 = sphi 0, %s26
      %s20 = sphi 0, %s18
      %s21 = sphi 0, %s19
      %s22 = sphi 0, %s20
      %s23 = sphi 0, %s21
      %s33 = sphi 0, %s35
      %s36 = sphi 0, %s33
      %s37 = sphi 0, %s36
      %s53 = sphi 0, %s37
      %s61 = sphi 0, %s63
      %s64 = sphi 0, %s61
      %s65 = sphi 0, %s64
      %s81 = sphi 0, %s65
      %s85 = sphi 0, %s85
      %s87 = sphi 0, %s85
      %s88 = sphi 0, %s87
      %s102 = sphi 0, %s88
      %s106 = sphi 0, %s106
      %s108 = sphi 0, %s106
      %s109 = sphi 0, %s108
      %s123 = sphi 0, %s109
      %s129 = sphi 0, %s131
      %s132 = sphi 0, %s129
      %s133 = sphi 0, %s132
      %s149 = sphi 0, %s133
      %s155 = sphi 0, %s157
      %s158 = sphi 0, %s155
      %s159 = sphi 0, %s158
      %s175 = sphi 0, %s159
    $region4: #{gcn_forward.2} parent=1 // loop_header_branch
      %14 = sbr.rel (%p12) target = $region8
    $region5: #{gcn_forward.2} parent=1 // loop_body
      %s16 = ssub.s32 %s11, 1
      %s17 = ssub.s32 %s11, 2
      %s24 = sadd.s32 1, %s19
      %p25 = scmp.ge.s32.totalorder %s24, 2
      %s26 = scalar_select %p25, 0, %s24
      %s27 = sadd.s32 1, %s18
      %s28 = scalar_select %p25, %s27, %s18
      %p29 = scmp.ge.s32.totalorder %s28, 2
      %s30 = scalar_select %p29, 0, %s28
      %s31 = ssub.s32 %s19, %s26
      %p32 = scmp.eq.s32.totalorder %s31, 0
      %s34 = sadd.s32 %s33, 1
      %s35 = scalar_select %p32, %s33, %s34
      %p38 = pneg %p32
      %p39 = scmp.eq.s32.totalorder %s11, 3
      %p40 = por %p38, %p39
      %p41 = scmp.ne.s32.totalorder %s33, %s36
      %p42 = scmp.eq.s32.totalorder %s11, 0
      %p43 = por %p41, %p42
      %p44 = scmp.ne.s32.totalorder %s33, %s36
      %p45 = scmp.eq.s32.totalorder %s16, 3
      %p46 = por %p44, %p45
      %p47 = scmp.ne.s32.totalorder %s36, %s37
      %p48 = scmp.eq.s32.totalorder %s16, 0
      %p49 = por %p47, %p48
      %p50 = scmp.ne.s32.totalorder %s36, %s37
      %p51 = scmp.eq.s32.totalorder %s17, 3
      %p52 = por %p50, %p51
      %p54 = scmp.ne.s32.totalorder %s37, %s53
      %p55 = scmp.eq.s32.totalorder %s17, 0
      %p56 = por %p54, %p55
      %s57 = ssub.s32 %s18, %s30
      %s58 = ssub.s32 %s19, %s26
      %s59 = sor.u32 %s57, %s58
      %p60 = scmp.eq.s32.totalorder %s59, 0
      %s62 = sadd.s32 %s61, 1
      %s63 = scalar_select %p60, %s61, %s62
      %p66 = pneg %p60
      %p67 = scmp.eq.s32.totalorder %s11, 3
      %p68 = por %p66, %p67
      %p69 = scmp.ne.s32.totalorder %s61, %s64
      %p70 = scmp.eq.s32.totalorder %s11, 0
      %p71 = por %p69, %p70
      %p72 = scmp.ne.s32.totalorder %s61, %s64
      %p73 = scmp.eq.s32.totalorder %s16, 3
      %p74 = por %p72, %p73
      %p75 = scmp.ne.s32.totalorder %s64, %s65
      %p76 = scmp.eq.s32.totalorder %s16, 0
      %p77 = por %p75, %p76
      %p78 = scmp.ne.s32.totalorder %s64, %s65
      %p79 = scmp.eq.s32.totalorder %s17, 3
      %p80 = por %p78, %p79
      %p82 = scmp.ne.s32.totalorder %s65, %s81
      %p83 = scmp.eq.s32.totalorder %s17, 0
      %p84 = por %p82, %p83
      %s86 = sadd.s32 %s85, 1
      %p89 = scmp.eq.s32.totalorder %s11, 3
      %p90 = scmp.ne.s32.totalorder %s85, %s87
      %p91 = scmp.eq.s32.totalorder %s11, 0
      %p92 = por %p90, %p91
      %p93 = scmp.ne.s32.totalorder %s85, %s87
      %p94 = scmp.eq.s32.totalorder %s16, 3
      %p95 = por %p93, %p94
      %p96 = scmp.ne.s32.totalorder %s87, %s88
      %p97 = scmp.eq.s32.totalorder %s16, 0
      %p98 = por %p96, %p97
      %p99 = scmp.ne.s32.totalorder %s87, %s88
      %p100 = scmp.eq.s32.totalorder %s17, 3
      %p101 = por %p99, %p100
      %p103 = scmp.ne.s32.totalorder %s88, %s102
      %p104 = scmp.eq.s32.totalorder %s17, 0
      %p105 = por %p103, %p104
      %s107 = sadd.s32 %s106, 1
      %p110 = scmp.eq.s32.totalorder %s11, 3
      %p111 = scmp.ne.s32.totalorder %s106, %s108
      %p112 = scmp.eq.s32.totalorder %s11, 0
      %p113 = por %p111, %p112
      %p114 = scmp.ne.s32.totalorder %s106, %s108
      %p115 = scmp.eq.s32.totalorder %s16, 3
      %p116 = por %p114, %p115
      %p117 = scmp.ne.s32.totalorder %s108, %s109
      %p118 = scmp.eq.s32.totalorder %s16, 0
      %p119 = por %p117, %p118
      %p120 = scmp.ne.s32.totalorder %s108, %s109
      %p121 = scmp.eq.s32.totalorder %s17, 3
      %p122 = por %p120, %p121
      %p124 = scmp.ne.s32.totalorder %s109, %s123
      %p125 = scmp.eq.s32.totalorder %s17, 0
      %p126 = por %p124, %p125
      %s127 = ssub.s32 %s18, %s30
      %p128 = scmp.eq.s32.totalorder %s127, 0
      %s130 = sadd.s32 %s129, 1
      %s131 = scalar_select %p128, %s129, %s130
      %p134 = pneg %p128
      %p135 = scmp.eq.s32.totalorder %s11, 3
      %p136 = por %p134, %p135
      %p137 = scmp.ne.s32.totalorder %s129, %s132
      %p138 = scmp.eq.s32.totalorder %s11, 0
      %p139 = por %p137, %p138
      %p140 = scmp.ne.s32.totalorder %s129, %s132
      %p141 = scmp.eq.s32.totalorder %s16, 3
      %p142 = por %p140, %p141
      %p143 = scmp.ne.s32.totalorder %s132, %s133
      %p144 = scmp.eq.s32.totalorder %s16, 0
      %p145 = por %p143, %p144
      %p146 = scmp.ne.s32.totalorder %s132, %s133
      %p147 = scmp.eq.s32.totalorder %s17, 3
      %p148 = por %p146, %p147
      %p150 = scmp.ne.s32.totalorder %s133, %s149
      %p151 = scmp.eq.s32.totalorder %s17, 0
      %p152 = por %p150, %p151
      %s153 = ssub.s32 %s18, %s30
      %p154 = scmp.eq.s32.totalorder %s153, 0
      %s156 = sadd.s32 %s155, 1
      %s157 = scalar_select %p154, %s155, %s156
      %p160 = pneg %p154
      %p161 = scmp.eq.s32.totalorder %s11, 3
      %p162 = por %p160, %p161
      %p163 = scmp.ne.s32.totalorder %s155, %s158
      %p164 = scmp.eq.s32.totalorder %s11, 0
      %p165 = por %p163, %p164
      %p166 = scmp.ne.s32.totalorder %s155, %s158
      %p167 = scmp.eq.s32.totalorder %s16, 3
      %p168 = por %p166, %p167
      %p169 = scmp.ne.s32.totalorder %s158, %s159
      %p170 = scmp.eq.s32.totalorder %s16, 0
      %p171 = por %p169, %p170
      %p172 = scmp.ne.s32.totalorder %s158, %s159
      %p173 = scmp.eq.s32.totalorder %s17, 3
      %p174 = por %p172, %p173
      %p176 = scmp.ne.s32.totalorder %s159, %s175
      %p177 = scmp.eq.s32.totalorder %s17, 0
      %p178 = por %p176, %p177
      %p179 = scmp.le.s32.totalorder 1, %s11
      %p180 = scmp.lt.s32.totalorder %s11, 5
      %p181 = pnand %p179, %p180
      %p182 = pneg %p181
      // Predicated region
      $region9: #{gcn_forward.2} parent=5 // pred_check
        _
      $region10: #{gcn_forward.2} parent=5 // pred_check_branch
        %184 = sbr.rel (%p181) target = $region12
      $region11: #{gcn_forward.2} parent=5 // pred_region
        %s185 = ssub.s32 %s11, 1
        // Predicated region
        $region13: #{gcn_forward.2} parent=11 // pred_check
          %p186 = pneg %p98
        $region14: #{gcn_forward.2} parent=11 // pred_check_branch
          %188 = sbr.rel (%p186) target = $region16
        $region15: #{gcn_forward.2} parent=11 // pred_region
          _
        $region16: #{gcn_forward.2} parent=11 // pred_fallthru
          _
        // Predicated region
        $region17: #{gcn_forward.2} parent=11 // pred_check
          %p189 = pneg %p119
        $region18: #{gcn_forward.2} parent=11 // pred_check_branch
          %191 = sbr.rel (%p189) target = $region20
        $region19: #{gcn_forward.2} parent=11 // pred_region
          _
        $region20: #{gcn_forward.2} parent=11 // pred_fallthru
          _
      $region12: #{gcn_forward.2} parent=5 // pred_fallthru
        _
      %p192 = scmp.lt.s32.totalorder %s11, 4
      // Predicated region
      $region21: #{gcn_forward.2} parent=5 // pred_check
        %p193 = pneg %p192
      $region22: #{gcn_forward.2} parent=5 // pred_check_branch
        %195 = sbr.rel (%p193) target = $region24
      $region23: #{gcn_forward.2} parent=5 // pred_region
        // Predicated region
        $region25: #{gcn_forward.2} parent=23 // pred_check
          %p196 = pneg %p43
        $region26: #{gcn_forward.2} parent=23 // pred_check_branch
          %198 = sbr.rel (%p196) target = $region28
        $region27: #{gcn_forward.2} parent=23 // pred_region
          %s199 = smul.u32 16, %s19
          %p200 = scmp.lt.s32.totalorder %s199, 31
          %s201 = scalar_select %p200, %s199, 31
          %s202 = smul.addr %s201, 8
          %s203 = scalar_lea.vmem %s0, %s202
          %s204 = smul.u32 16, %s19
        $region28: #{gcn_forward.2} parent=23 // pred_fallthru
          _
        // Predicated region
        $region29: #{gcn_forward.2} parent=23 // pred_check
          %p205 = pneg %p71
        $region30: #{gcn_forward.2} parent=23 // pred_check_branch
          %207 = sbr.rel (%p205) target = $region32
        $region31: #{gcn_forward.2} parent=23 // pred_region
          %s208 = sand.u32 %s61, 1
          %s209 = sand.u32 %s61, 1
          %s210 = smul.addr %s209, 64
          %s211 = scalar_lea.vmem [#allocation3], %s210
          %s212 = smul.u32 16, %s18
          %s213 = smul.addr %s212, 2
          %s214 = sadd.s32 %s19, %s213
          %s215 = smul.addr %s214, 4
          %s216 = scalar_lea.vmem %s1, %s215
          // Predicated region
          $region33: #{gcn_forward.2} parent=31 // pred_check
            _
          $region34: #{gcn_forward.2} parent=31 // pred_check_branch
            %218 = sbr.rel (0) target = $region36
          $region35: #{gcn_forward.2} parent=31 // pred_region
            // Predicated region
            $region37: #{gcn_forward.2} parent=35 // pred_check
              _
            $region38: #{gcn_forward.2} parent=35 // pred_check_branch
              %220 = sbr.rel target = $region40
            $region39: #{gcn_forward.2} parent=35 // pred_region
              // Predicated region
              $region52: #{gcn_forward.2} parent=39 // pred_check
                _
              $region53: #{gcn_forward.2} parent=39 // pred_check_branch
                %265 = sbr.rel (0) target = $region55
              $region54: #{gcn_forward.2} parent=39 // pred_region
                loop: start=0, step=1, limit=1
                $region56: #{gcn_forward.2} parent=54 // loop_pre_header
                  _
                $region57: #{gcn_forward.2} parent=54 // loop_header
                  %s267 = sphi 0, %s271
                  %p268 = scmp.ge.s32.totalorder %s267, 1
                  %s272 = sphi %s216, %s216
                  %s273 = sphi %s211, %s211
                $region58: #{gcn_forward.2} parent=54 // loop_header_branch
                  %270 = sbr.rel (%p268) target = $region62
                $region59: #{gcn_forward.2} parent=54 // loop_body
                  _
                $region60: #{gcn_forward.2} parent=54 // loop_footer
                  %s271 = sadd.s32 1, %s267
                $region61: #{gcn_forward.2} parent=54 // loop_footer_branch
                  %266 = sbr.rel target = $region57
                $region62: #{gcn_forward.2} parent=54 // loop_exit
                  _
                loop: start=0, step=1, limit=1
                $region63: #{gcn_forward.2} parent=54 // loop_pre_header
                  _
                $region64: #{gcn_forward.2} parent=54 // loop_header
                  %s276 = sphi 0, %s280
                  %p277 = scmp.ge.s32.totalorder %s276, 1
                  %s281 = sphi %s216, %s216
                  %s282 = sphi %s211, %s211
                $region65: #{gcn_forward.2} parent=54 // loop_header_branch
                  %279 = sbr.rel (%p277) target = $region69
                $region66: #{gcn_forward.2} parent=54 // loop_body
                  %v283 = vld [vmem:[%s281] sm:$0xf]
                  %284 = vst [vmem:[%s282] sm:$0xf] %v283
                  %v285 = vld [vmem:[%s281 + $0x8] sm:$0xf]
                  %286 = vst [vmem:[%s282 + $0x4] sm:$0xf] %v285
                  %v287 = vld [vmem:[%s281 + $0x10] sm:$0xf]
                  %288 = vst [vmem:[%s282 + $0x8] sm:$0xf] %v287
                  %v289 = vld [vmem:[%s281 + $0x18] sm:$0xf]
                  %290 = vst [vmem:[%s282 + $0xc] sm:$0xf] %v289
                  %v291 = vld [vmem:[%s281 + $0x20] sm:$0xf]
                  %292 = vst [vmem:[%s282 + $0x10] sm:$0xf] %v291
                  %v293 = vld [vmem:[%s281 + $0x28] sm:$0xf]
                  %294 = vst [vmem:[%s282 + $0x14] sm:$0xf] %v293
                  %v295 = vld [vmem:[%s281 + $0x30] sm:$0xf]
                  %296 = vst [vmem:[%s282 + $0x18] sm:$0xf] %v295
                  %v297 = vld [vmem:[%s281 + $0x38] sm:$0xf]
                  %298 = vst [vmem:[%s282 + $0x1c] sm:$0xf] %v297
                  %v299 = vld [vmem:[%s281 + $0x40] sm:$0xf]
                  %300 = vst [vmem:[%s282 + $0x20] sm:$0xf] %v299
                  %v301 = vld [vmem:[%s281 + $0x48] sm:$0xf]
                  %302 = vst [vmem:[%s282 + $0x24] sm:$0xf] %v301
                  %v303 = vld [vmem:[%s281 + $0x50] sm:$0xf]
                  %304 = vst [vmem:[%s282 + $0x28] sm:$0xf] %v303
                  %v305 = vld [vmem:[%s281 + $0x58] sm:$0xf]
                  %306 = vst [vmem:[%s282 + $0x2c] sm:$0xf] %v305
                  %v307 = vld [vmem:[%s281 + $0x60] sm:$0xf]
                  %308 = vst [vmem:[%s282 + $0x30] sm:$0xf] %v307
                  %v309 = vld [vmem:[%s281 + $0x68] sm:$0xf]
                  %310 = vst [vmem:[%s282 + $0x34] sm:$0xf] %v309
                  %v311 = vld [vmem:[%s281 + $0x70] sm:$0xf]
                  %312 = vst [vmem:[%s282 + $0x38] sm:$0xf] %v311
                  %v313 = vld [vmem:[%s281 + $0x78] sm:$0xf]
                  %314 = vst [vmem:[%s282 + $0x3c] sm:$0xf] %v313
                $region67: #{gcn_forward.2} parent=54 // loop_footer
                  %s280 = sadd.s32 1, %s276
                $region68: #{gcn_forward.2} parent=54 // loop_footer_branch
                  %275 = sbr.rel target = $region64
                $region69: #{gcn_forward.2} parent=54 // loop_exit
                  _
              $region55: #{gcn_forward.2} parent=39 // pred_fallthru
                _
            $region40: #{gcn_forward.2} parent=35 // pred_fallthru
              _
            // Predicated region
            $region41: #{gcn_forward.2} parent=35 // pred_check
              _
            $region42: #{gcn_forward.2} parent=35 // pred_check_branch
              %222 = sbr.rel (0) target = $region44
            $region43: #{gcn_forward.2} parent=35 // pred_region
              loop: start=0, step=1, limit=1
              $region45: #{gcn_forward.2} parent=43 // loop_pre_header
                _
              $region46: #{gcn_forward.2} parent=43 // loop_header
                %s225 = sphi 0, %s229
                %p226 = scmp.ge.s32.totalorder %s225, 1
                %s230 = sphi %s216, %s216
                %s231 = sphi %s211, %s211
              $region47: #{gcn_forward.2} parent=43 // loop_header_branch
                %228 = sbr.rel (%p226) target = $region51
              $region48: #{gcn_forward.2} parent=43 // loop_body
                %v232 = vld [vmem:[%s230] sm:$0xf]
                %233 = vst [vmem:[%s231] sm:$0xf] %v232
                %v234 = vld [vmem:[%s230 + $0x8] sm:$0xf]
                %235 = vst [vmem:[%s231 + $0x4] sm:$0xf] %v234
                %v236 = vld [vmem:[%s230 + $0x10] sm:$0xf]
                %237 = vst [vmem:[%s231 + $0x8] sm:$0xf] %v236
                %v238 = vld [vmem:[%s230 + $0x18] sm:$0xf]
                %239 = vst [vmem:[%s231 + $0xc] sm:$0xf] %v238
                %v240 = vld [vmem:[%s230 + $0x20] sm:$0xf]
                %241 = vst [vmem:[%s231 + $0x10] sm:$0xf] %v240
                %v242 = vld [vmem:[%s230 + $0x28] sm:$0xf]
                %243 = vst [vmem:[%s231 + $0x14] sm:$0xf] %v242
                %v244 = vld [vmem:[%s230 + $0x30] sm:$0xf]
                %245 = vst [vmem:[%s231 + $0x18] sm:$0xf] %v244
                %v246 = vld [vmem:[%s230 + $0x38] sm:$0xf]
                %247 = vst [vmem:[%s231 + $0x1c] sm:$0xf] %v246
                %v248 = vld [vmem:[%s230 + $0x40] sm:$0xf]
                %249 = vst [vmem:[%s231 + $0x20] sm:$0xf] %v248
                %v250 = vld [vmem:[%s230 + $0x48] sm:$0xf]
                %251 = vst [vmem:[%s231 + $0x24] sm:$0xf] %v250
                %v252 = vld [vmem:[%s230 + $0x50] sm:$0xf]
                %253 = vst [vmem:[%s231 + $0x28] sm:$0xf] %v252
                %v254 = vld [vmem:[%s230 + $0x58] sm:$0xf]
                %255 = vst [vmem:[%s231 + $0x2c] sm:$0xf] %v254
                %v256 = vld [vmem:[%s230 + $0x60] sm:$0xf]
                %257 = vst [vmem:[%s231 + $0x30] sm:$0xf] %v256
                %v258 = vld [vmem:[%s230 + $0x68] sm:$0xf]
                %259 = vst [vmem:[%s231 + $0x34] sm:$0xf] %v258
                %v260 = vld [vmem:[%s230 + $0x70] sm:$0xf]
                %261 = vst [vmem:[%s231 + $0x38] sm:$0xf] %v260
                %v262 = vld [vmem:[%s230 + $0x78] sm:$0xf]
                %263 = vst [vmem:[%s231 + $0x3c] sm:$0xf] %v262
              $region49: #{gcn_forward.2} parent=43 // loop_footer
                %s229 = sadd.s32 1, %s225
              $region50: #{gcn_forward.2} parent=43 // loop_footer_branch
                %224 = sbr.rel target = $region46
              $region51: #{gcn_forward.2} parent=43 // loop_exit
                _
            $region44: #{gcn_forward.2} parent=35 // pred_fallthru
              _
          $region36: #{gcn_forward.2} parent=31 // pred_fallthru
            _
          %315 = vnop
        $region32: #{gcn_forward.2} parent=23 // pred_fallthru
          _
        // Predicated region
        $region70: #{gcn_forward.2} parent=23 // pred_check
          %p316 = pneg %p139
        $region71: #{gcn_forward.2} parent=23 // pred_check_branch
          %318 = sbr.rel (%p316) target = $region73
        $region72: #{gcn_forward.2} parent=23 // pred_region
          %s319 = smul.u32 16, %s18
          %p320 = scmp.lt.s32.totalorder %s319, 31
          %s321 = scalar_select %p320, %s319, 31
          %s322 = smul.addr %s321, 8
          %s323 = scalar_lea.vmem %s4, %s322
          %s324 = smul.u32 16, %s18
        $region73: #{gcn_forward.2} parent=23 // pred_fallthru
          _
      $region24: #{gcn_forward.2} parent=5 // pred_fallthru
        _
      %p325 = scmp.le.s32.totalorder 1, %s11
      %p326 = scmp.lt.s32.totalorder %s11, 5
      %p327 = pnand %p325, %p326
      %p328 = pneg %p327
      // Predicated region
      $region74: #{gcn_forward.2} parent=5 // pred_check
        _
      $region75: #{gcn_forward.2} parent=5 // pred_check_branch
        %330 = sbr.rel (%p327) target = $region77
      $region76: #{gcn_forward.2} parent=5 // pred_region
        %s331 = ssub.s32 %s11, 1
        %s332 = sand.u32 %s64, 1
        %s333 = sand.u32 %s64, 1
        %s334 = smul.addr %s333, 64
        %s335 = scalar_lea.vmem [#allocation3], %s334
        // Predicated region
        $region78: #{gcn_forward.2} parent=76 // pred_check
          %p336 = pneg %p77
        $region79: #{gcn_forward.2} parent=76 // pred_check_branch
          %338 = sbr.rel (%p336) target = $region81
        $region80: #{gcn_forward.2} parent=76 // pred_region
          _
        $region81: #{gcn_forward.2} parent=76 // pred_fallthru
          _
        %s339 = smul.u32 16, %s21
        %p340 = scmp.lt.s32.totalorder %s339, 31
        %s341 = scalar_select %p340, %s339, 31
        %s342 = smul.addr %s341, 8
        %s343 = scalar_lea.vmem %s0, %s342
        %p344 = pneg %p49
        %p345 = pneg %p46
        %s346 = sand.u32 %s64, 1
        %s347 = sand.u32 %s64, 1
        %s348 = smul.addr %s347, 64
        %s349 = scalar_lea.vmem [#allocation3], %s348
        %p350 = pneg %p77
        %p351 = pneg %p74
        %p352 = pneg %p98
        %p353 = pneg %p95
        %p354 = pneg %p119
        %p355 = pneg %p116
        %s356 = smul.u32 16, %s20
        %p357 = scmp.lt.s32.totalorder %s356, 31
        %s358 = scalar_select %p357, %s356, 31
        %s359 = smul.addr %s358, 8
        %s360 = scalar_lea.vmem %s4, %s359
        %p361 = pneg %p145
        %p362 = pneg %p142
        %p363 = pneg %p171
        %p364 = pneg %p168
        %s365 = smul.u32 16, %s20
        %p366 = scmp.lt.s32.totalorder %s365, 31
        %s367 = scalar_select %p366, %s365, 31
        %s368 = smul.addr %s367, 8
        %s369 = scalar_lea.vmem %s5, %s368
        %s370 = smul.u32 16, %s21
        %p371 = scmp.lt.s32.totalorder %s370, 31
        %s372 = scalar_select %p371, %s370, 31
        %s373 = smul.addr %s372, 8
        %s374 = scalar_lea.vmem %s0, %s373
        %s375 = smul.u32 16, %s21
        %s376 = smul.u32 16, %s20
        %s377 = smul.u32 16, %s20
        %p378 = scmp.lt.s32.totalorder %s377, 31
        %s379 = scalar_select %p378, %s377, 31
        %s380 = smul.addr %s379, 8
        %s381 = scalar_lea.vmem %s4, %s380
        %s382 = smul.u32 16, %s20
        %s383 = smul.u32 16, %s20
        %p384 = scmp.lt.s32.totalorder %s383, 31
        %s385 = scalar_select %p384, %s383, 31
        %s386 = smul.addr %s385, 8
        %s387 = scalar_lea.vmem %s5, %s386
        %s388 = smul.u32 16, %s20
        %p390 = scmp.eq.s32.totalorder %s21, 0
        // Predicated region
        $region82: #{gcn_forward.2} parent=76 // pred_check
          %p391 = pneg %p390
        $region83: #{gcn_forward.2} parent=76 // pred_check_branch
          %393 = sbr.rel (%p391) target = $region85
        $region84: #{gcn_forward.2} parent=76 // pred_region
          %394 = vst [vmem:[#allocation2] sm:$0xff] 0.0
          %395 = vst [vmem:[#allocation2 + $0x8] sm:$0xff] 0.0
          %396 = vst [vmem:[#allocation2 + $0x10] sm:$0xff] 0.0
          %397 = vst [vmem:[#allocation2 + $0x18] sm:$0xff] 0.0
          %398 = vst [vmem:[#allocation2 + $0x20] sm:$0xff] 0.0
          %399 = vst [vmem:[#allocation2 + $0x28] sm:$0xff] 0.0
          %400 = vst [vmem:[#allocation2 + $0x30] sm:$0xff] 0.0
          %401 = vst [vmem:[#allocation2 + $0x38] sm:$0xff] 0.0
          %402 = vst [vmem:[#allocation2 + $0x40] sm:$0xff] 0.0
          %403 = vst [vmem:[#allocation2 + $0x48] sm:$0xff] 0.0
          %404 = vst [vmem:[#allocation2 + $0x50] sm:$0xff] 0.0
          %405 = vst [vmem:[#allocation2 + $0x58] sm:$0xff] 0.0
          %406 = vst [vmem:[#allocation2 + $0x60] sm:$0xff] 0.0
          %407 = vst [vmem:[#allocation2 + $0x68] sm:$0xff] 0.0
          %408 = vst [vmem:[#allocation2 + $0x70] sm:$0xff] 0.0
          %409 = vst [vmem:[#allocation2 + $0x78] sm:$0xff] 0.0
        $region85: #{gcn_forward.2} parent=76 // pred_fallthru
          _
        %v410 = vld [vmem:[%s374] sm:$0xff]
        %v411 = vld [vmem:[%s374 + $0x8] sm:$0xff]
        %v412 = vld [vmem:[%s374 + $0x10] sm:$0xff]
        %v413 = vld [vmem:[%s374 + $0x18] sm:$0xff]
        %v414 = vld [vmem:[%s374 + $0x20] sm:$0xff]
        %v415 = vld [vmem:[%s374 + $0x28] sm:$0xff]
        %v416 = vld [vmem:[%s374 + $0x30] sm:$0xff]
        %v417 = vld [vmem:[%s374 + $0x38] sm:$0xff]
        %v418 = vld [vmem:[%s374 + $0x40] sm:$0xff]
        %v419 = vld [vmem:[%s374 + $0x48] sm:$0xff]
        %v420 = vld [vmem:[%s374 + $0x50] sm:$0xff]
        %v421 = vld [vmem:[%s374 + $0x58] sm:$0xff]
        %v422 = vld [vmem:[%s374 + $0x60] sm:$0xff]
        %v423 = vld [vmem:[%s374 + $0x68] sm:$0xff]
        %v424 = vld [vmem:[%s374 + $0x70] sm:$0xff]
        %v425 = vld [vmem:[%s374 + $0x78] sm:$0xff]
        %v426 = vld [vmem:[%s2] sm:$0xff]
        %v427 = vld [vmem:[%s2 + $0x8] sm:$0xff]
        %v428 = vld [vmem:[%s2 + $0x10] sm:$0xff]
        %v429 = vld [vmem:[%s2 + $0x18] sm:$0xff]
        %v430 = vld [vmem:[%s2 + $0x20] sm:$0xff]
        %v431 = vld [vmem:[%s2 + $0x28] sm:$0xff]
        %v432 = vld [vmem:[%s2 + $0x30] sm:$0xff]
        %v433 = vld [vmem:[%s2 + $0x38] sm:$0xff]
        %v434 = vld [vmem:[%s2 + $0x40] sm:$0xff]
        %v435 = vld [vmem:[%s2 + $0x48] sm:$0xff]
        %v436 = vld [vmem:[%s2 + $0x50] sm:$0xff]
        %v437 = vld [vmem:[%s2 + $0x58] sm:$0xff]
        %v438 = vld [vmem:[%s2 + $0x60] sm:$0xff]
        %v439 = vld [vmem:[%s2 + $0x68] sm:$0xff]
        %v440 = vld [vmem:[%s2 + $0x70] sm:$0xff]
        %v441 = vld [vmem:[%s2 + $0x78] sm:$0xff]
        %442 = vmatprep.subr.mxu0 0.0
        %443 = vmatpush1.msra.mxu0 %v426
        %444 = vmatprep.subr.mxu0 0.0
        %445 = vmatpush1.msra.mxu0 %v427
        %446 = vmatprep.subr.mxu0 0.0
        %447 = vmatpush1.msra.mxu0 %v428
        %448 = vmatprep.subr.mxu0 0.0
        %449 = vmatpush1.msra.mxu0 %v429
        %450 = vmatprep.subr.mxu0 0.0
        %451 = vmatpush1.msra.mxu0 %v430
        %452 = vmatprep.subr.mxu0 0.0
        %453 = vmatpush1.msra.mxu0 %v431
        %454 = vmatprep.subr.mxu0 0.0
        %455 = vmatpush1.msra.mxu0 %v432
        %456 = vmatprep.subr.mxu0 0.0
        %457 = vmatpush1.msra.mxu0 %v433
        %458 = vmatprep.subr.mxu0 0.0
        %459 = vmatpush1.msra.mxu0 %v434
        %460 = vmatprep.subr.mxu0 0.0
        %461 = vmatpush1.msra.mxu0 %v435
        %462 = vmatprep.subr.mxu0 0.0
        %463 = vmatpush1.msra.mxu0 %v436
        %464 = vmatprep.subr.mxu0 0.0
        %465 = vmatpush1.msra.mxu0 %v437
        %466 = vmatprep.subr.mxu0 0.0
        %467 = vmatpush1.msra.mxu0 %v438
        %468 = vmatprep.subr.mxu0 0.0
        %469 = vmatpush1.msra.mxu0 %v439
        %470 = vmatprep.subr.mxu0 0.0
        %471 = vmatpush1.msra.mxu0 %v440
        %472 = vmatprep.subr.mxu0 0.0
        %473 = vmatpush1.msra.mxu0 %v441
        %474 = vmatprep.subr.mxu0 0.0
        %475 = vmatpush1.msra.mxu0 0.0
        %476 = vmatprep.subr.mxu0 0.0
        %477 = vmatpush1.msra.mxu0 0.0
        %478 = vmatprep.subr.mxu0 0.0
        %479 = vmatpush1.msra.mxu0 0.0
        %480 = vmatprep.subr.mxu0 0.0
        %481 = vmatpush1.msra.mxu0 0.0
        %482 = vmatprep.subr.mxu0 0.0
        %483 = vmatpush1.msra.mxu0 0.0
        %484 = vmatprep.subr.mxu0 0.0
        %485 = vmatpush1.msra.mxu0 0.0
        %486 = vmatprep.subr.mxu0 0.0
        %487 = vmatpush1.msra.mxu0 0.0
        %488 = vmatprep.subr.mxu0 0.0
        %489 = vmatpush1.msra.mxu0 0.0
        %490 = vmatprep.subr.mxu0 0.0
        %491 = vmatpush1.msra.mxu0 0.0
        %492 = vmatprep.subr.mxu0 0.0
        %493 = vmatpush1.msra.mxu0 0.0
        %494 = vmatprep.subr.mxu0 0.0
        %495 = vmatpush1.msra.mxu0 0.0
        %496 = vmatprep.subr.mxu0 0.0
        %497 = vmatpush1.msra.mxu0 0.0
        %498 = vmatprep.subr.mxu0 0.0
        %499 = vmatpush1.msra.mxu0 0.0
        %500 = vmatprep.subr.mxu0 0.0
        %501 = vmatpush1.msra.mxu0 0.0
        %502 = vmatprep.subr.mxu0 0.0
        %503 = vmatpush1.msra.mxu0 0.0
        %504 = vmatprep.subr.mxu0 0.0
        %505 = vmatpush1.msra.mxu0 0.0
        %506 = vmatprep.mubr.f32.mxu0 0.0
        %507 = vmatmul.mubr.f32.gmra.mrb[0].mxu0 %v410
        %v508 = vpop.f32.mrb[0].mxu0
        %v509 = vadd.f32 0.0, %v508
        %v510 = vpop.f32.mrb[0].mxu0
        %511 = vmatprep.mubr.f32.mxu0 0.0
        %512 = vmatmul.mubr.f32.gmra.mrb[0].mxu0 %v411
        %v513 = vpop.f32.mrb[0].mxu0
        %v514 = vadd.f32 0.0, %v513
        %v515 = vpop.f32.mrb[0].mxu0
        %516 = vmatprep.mubr.f32.mxu0 0.0
        %517 = vmatmul.mubr.f32.gmra.mrb[0].mxu0 %v412
        %v518 = vpop.f32.mrb[0].mxu0
        %v519 = vadd.f32 0.0, %v518
        %v520 = vpop.f32.mrb[0].mxu0
        %521 = vmatprep.mubr.f32.mxu0 0.0
        %522 = vmatmul.mubr.f32.gmra.mrb[0].mxu0 %v413
        %v523 = vpop.f32.mrb[0].mxu0
        %v524 = vadd.f32 0.0, %v523
        %v525 = vpop.f32.mrb[0].mxu0
        %526 = vmatprep.mubr.f32.mxu0 0.0
        %527 = vmatmul.mubr.f32.gmra.mrb[0].mxu0 %v414
        %v528 = vpop.f32.mrb[0].mxu0
        %v529 = vadd.f32 0.0, %v528
        %v530 = vpop.f32.mrb[0].mxu0
        %531 = vmatprep.mubr.f32.mxu0 0.0
        %532 = vmatmul.mubr.f32.gmra.mrb[0].mxu0 %v415
        %v533 = vpop.f32.mrb[0].mxu0
        %v534 = vadd.f32 0.0, %v533
        %v535 = vpop.f32.mrb[0].mxu0
        %536 = vmatprep.mubr.f32.mxu0 0.0
        %537 = vmatmul.mubr.f32.gmra.mrb[0].mxu0 %v416
        %v538 = vpop.f32.mrb[0].mxu0
        %v539 = vadd.f32 0.0, %v538
        %v540 = vpop.f32.mrb[0].mxu0
        %541 = vmatprep.mubr.f32.mxu0 0.0
        %542 = vmatmul.mubr.f32.gmra.mrb[0].mxu0 %v417
        %v543 = vpop.f32.mrb[0].mxu0
        %v544 = vadd.f32 0.0, %v543
        %v545 = vpop.f32.mrb[0].mxu0
        %546 = vmatprep.mubr.f32.mxu0 0.0
        %547 = vmatmul.mubr.f32.gmra.mrb[0].mxu0 %v418
        %v548 = vpop.f32.mrb[0].mxu0
        %v549 = vadd.f32 0.0, %v548
        %v550 = vpop.f32.mrb[0].mxu0
        %551 = vmatprep.mubr.f32.mxu0 0.0
        %552 = vmatmul.mubr.f32.gmra.mrb[0].mxu0 %v419
        %v553 = vpop.f32.mrb[0].mxu0
        %v554 = vadd.f32 0.0, %v553
        %v555 = vpop.f32.mrb[0].mxu0
        %556 = vmatprep.mubr.f32.mxu0 0.0
        %557 = vmatmul.mubr.f32.gmra.mrb[0].mxu0 %v420
        %v558 = vpop.f32.mrb[0].mxu0
        %v559 = vadd.f32 0.0, %v558
        %v560 = vpop.f32.mrb[0].mxu0
        %561 = vmatprep.mubr.f32.mxu0 0.0
        %562 = vmatmul.mubr.f32.gmra.mrb[0].mxu0 %v421
        %v563 = vpop.f32.mrb[0].mxu0
        %v564 = vadd.f32 0.0, %v563
        %v565 = vpop.f32.mrb[0].mxu0
        %566 = vmatprep.mubr.f32.mxu0 0.0
        %567 = vmatmul.mubr.f32.gmra.mrb[0].mxu0 %v422
        %v568 = vpop.f32.mrb[0].mxu0
        %v569 = vadd.f32 0.0, %v568
        %v570 = vpop.f32.mrb[0].mxu0
        %571 = vmatprep.mubr.f32.mxu0 0.0
        %572 = vmatmul.mubr.f32.gmra.mrb[0].mxu0 %v423
        %v573 = vpop.f32.mrb[0].mxu0
        %v574 = vadd.f32 0.0, %v573
        %v575 = vpop.f32.mrb[0].mxu0
        %576 = vmatprep.mubr.f32.mxu0 0.0
        %577 = vmatmul.mubr.f32.gmra.mrb[0].mxu0 %v424
        %v578 = vpop.f32.mrb[0].mxu0
        %v579 = vadd.f32 0.0, %v578
        %v580 = vpop.f32.mrb[0].mxu0
        %581 = vmatprep.mubr.f32.mxu0 0.0
        %582 = vmatmul.mubr.f32.gmra.mrb[0].mxu0 %v425
        %v583 = vpop.f32.mrb[0].mxu0
        %v584 = vadd.f32 0.0, %v583
        %v585 = vpop.f32.mrb[0].mxu0
        %586 = vdwg.mxu0
        %v587 = vld [vmem:[#allocation2] sm:$0xff]
        %v588 = vld [vmem:[#allocation2 + $0x8] sm:$0xff]
        %v589 = vld [vmem:[#allocation2 + $0x10] sm:$0xff]
        %v590 = vld [vmem:[#allocation2 + $0x18] sm:$0xff]
        %v591 = vld [vmem:[#allocation2 + $0x20] sm:$0xff]
        %v592 = vld [vmem:[#allocation2 + $0x28] sm:$0xff]
        %v593 = vld [vmem:[#allocation2 + $0x30] sm:$0xff]
        %v594 = vld [vmem:[#allocation2 + $0x38] sm:$0xff]
        %v595 = vld [vmem:[#allocation2 + $0x40] sm:$0xff]
        %v596 = vld [vmem:[#allocation2 + $0x48] sm:$0xff]
        %v597 = vld [vmem:[#allocation2 + $0x50] sm:$0xff]
        %v598 = vld [vmem:[#allocation2 + $0x58] sm:$0xff]
        %v599 = vld [vmem:[#allocation2 + $0x60] sm:$0xff]
        %v600 = vld [vmem:[#allocation2 + $0x68] sm:$0xff]
        %v601 = vld [vmem:[#allocation2 + $0x70] sm:$0xff]
        %v602 = vld [vmem:[#allocation2 + $0x78] sm:$0xff]
        %v603 = vld [vmem:[%s335] sm:$0xf]
        %v604 = vld [vmem:[%s335 + $0x4] sm:$0xf]
        %v605 = vld [vmem:[%s335 + $0x8] sm:$0xf]
        %v606 = vld [vmem:[%s335 + $0xc] sm:$0xf]
        %v607 = vld [vmem:[%s335 + $0x10] sm:$0xf]
        %v608 = vld [vmem:[%s335 + $0x14] sm:$0xf]
        %v609 = vld [vmem:[%s335 + $0x18] sm:$0xf]
        %v610 = vld [vmem:[%s335 + $0x1c] sm:$0xf]
        %v611 = vld [vmem:[%s335 + $0x20] sm:$0xf]
        %v612 = vld [vmem:[%s335 + $0x24] sm:$0xf]
        %v613 = vld [vmem:[%s335 + $0x28] sm:$0xf]
        %v614 = vld [vmem:[%s335 + $0x2c] sm:$0xf]
        %v615 = vld [vmem:[%s335 + $0x30] sm:$0xf]
        %v616 = vld [vmem:[%s335 + $0x34] sm:$0xf]
        %v617 = vld [vmem:[%s335 + $0x38] sm:$0xf]
        %v618 = vld [vmem:[%s335 + $0x3c] sm:$0xf]
        %v619 = vpack.c.bf16 %v514, %v509
        %v620 = vpack.c.bf16 %v524, %v519
        %v621 = vpack.c.bf16 %v534, %v529
        %v622 = vpack.c.bf16 %v544, %v539
        %v623 = vpack.c.bf16 %v554, %v549
        %v624 = vpack.c.bf16 %v564, %v559
        %v625 = vpack.c.bf16 %v574, %v569
        %v626 = vpack.c.bf16 %v584, %v579
        %v643 = vunpack.c.l.b16 %v603
        %v644 = vunpack.c.l.b16 %v604
        %v645 = vunpack.c.l.b16 %v605
        %v646 = vunpack.c.l.b16 %v606
        %v647 = vunpack.c.l.b16 %v607
        %v648 = vunpack.c.l.b16 %v608
        %v649 = vunpack.c.l.b16 %v609
        %v650 = vunpack.c.l.b16 %v610
        %v651 = vunpack.c.l.b16 %v611
        %v652 = vunpack.c.l.b16 %v612
        %v653 = vunpack.c.l.b16 %v613
        %v654 = vunpack.c.l.b16 %v614
        %v655 = vunpack.c.l.b16 %v615
        %v656 = vunpack.c.l.b16 %v616
        %v657 = vunpack.c.l.b16 %v617
        %v658 = vunpack.c.l.b16 %v618
        %v659 = vpack.c.b16 %v644, %v643
        %v660 = vpack.c.b16 %v646, %v645
        %v661 = vpack.c.b16 %v648, %v647
        %v662 = vpack.c.b16 %v650, %v649
        %v663 = vpack.c.b16 %v652, %v651
        %v664 = vpack.c.b16 %v654, %v653
        %v665 = vpack.c.b16 %v656, %v655
        %v666 = vpack.c.b16 %v658, %v657
        %675 = vmatprep.subr.bf16.mxu0 0
        %676 = vmatpush1.bf16.msra.mxu0 %v619
        %677 = vmatprep.subr.bf16.mxu0 0
        %678 = vmatpush1.bf16.msra.mxu0 %v620
        %679 = vmatprep.subr.bf16.mxu0 0
        %680 = vmatpush1.bf16.msra.mxu0 %v621
        %681 = vmatprep.subr.bf16.mxu0 0
        %682 = vmatpush1.bf16.msra.mxu0 %v622
        %683 = vmatprep.subr.bf16.mxu0 0
        %684 = vmatpush1.bf16.msra.mxu0 %v623
        %685 = vmatprep.subr.bf16.mxu0 0
        %686 = vmatpush1.bf16.msra.mxu0 %v624
        %687 = vmatprep.subr.bf16.mxu0 0
        %688 = vmatpush1.bf16.msra.mxu0 %v625
        %689 = vmatprep.subr.bf16.mxu0 0
        %690 = vmatpush1.bf16.msra.mxu0 %v626
        %691 = vmatprep.subr.bf16.mxu0 0
        %692 = vmatpush1.bf16.msra.mxu0 0
        %693 = vmatprep.subr.bf16.mxu0 0
        %694 = vmatpush1.bf16.msra.mxu0 0
        %695 = vmatprep.subr.bf16.mxu0 0
        %696 = vmatpush1.bf16.msra.mxu0 0
        %697 = vmatprep.subr.bf16.mxu0 0
        %698 = vmatpush1.bf16.msra.mxu0 0
        %699 = vmatprep.subr.bf16.mxu0 0
        %700 = vmatpush1.bf16.msra.mxu0 0
        %701 = vmatprep.subr.bf16.mxu0 0
        %702 = vmatpush1.bf16.msra.mxu0 0
        %703 = vmatprep.subr.bf16.mxu0 0
        %704 = vmatpush1.bf16.msra.mxu0 0
        %705 = vmatprep.subr.bf16.mxu0 0
        %706 = vmatpush1.bf16.msra.mxu0 0
        %707 = vmatprep.mubr.bf16.mxu0 0
        %708 = vmatmul.mubr.bf16.gmra.mrb[0].mxu0 %v659
        %v709 = vpop.f32.mrb[0].mxu0
        %v710 = vadd.f32 0.0, %v709
        %v711 = vpop.f32.mrb[0].mxu0
        %v712 = vpop.f32.mrb[0].mxu0
        %v713 = vadd.f32 0.0, %v712
        %v714 = vpop.f32.mrb[0].mxu0
        %715 = vmatprep.mubr.bf16.mxu0 0
        %716 = vmatmul.mubr.bf16.gmra.mrb[0].mxu0 %v660
        %v717 = vpop.f32.mrb[0].mxu0
        %v718 = vadd.f32 0.0, %v717
        %v719 = vpop.f32.mrb[0].mxu0
        %v720 = vpop.f32.mrb[0].mxu0
        %v721 = vadd.f32 0.0, %v720
        %v722 = vpop.f32.mrb[0].mxu0
        %723 = vmatprep.mubr.bf16.mxu0 0
        %724 = vmatmul.mubr.bf16.gmra.mrb[0].mxu0 %v661
        %v725 = vpop.f32.mrb[0].mxu0
        %v726 = vadd.f32 0.0, %v725
        %v727 = vpop.f32.mrb[0].mxu0
        %v728 = vpop.f32.mrb[0].mxu0
        %v729 = vadd.f32 0.0, %v728
        %v730 = vpop.f32.mrb[0].mxu0
        %731 = vmatprep.mubr.bf16.mxu0 0
        %732 = vmatmul.mubr.bf16.gmra.mrb[0].mxu0 %v662
        %v733 = vpop.f32.mrb[0].mxu0
        %v734 = vadd.f32 0.0, %v733
        %v735 = vpop.f32.mrb[0].mxu0
        %v736 = vpop.f32.mrb[0].mxu0
        %v737 = vadd.f32 0.0, %v736
        %v738 = vpop.f32.mrb[0].mxu0
        %739 = vmatprep.mubr.bf16.mxu0 0
        %740 = vmatmul.mubr.bf16.gmra.mrb[0].mxu0 %v663
        %v741 = vpop.f32.mrb[0].mxu0
        %v742 = vadd.f32 0.0, %v741
        %v743 = vpop.f32.mrb[0].mxu0
        %v744 = vpop.f32.mrb[0].mxu0
        %v745 = vadd.f32 0.0, %v744
        %v746 = vpop.f32.mrb[0].mxu0
        %747 = vmatprep.mubr.bf16.mxu0 0
        %748 = vmatmul.mubr.bf16.gmra.mrb[0].mxu0 %v664
        %v749 = vpop.f32.mrb[0].mxu0
        %v750 = vadd.f32 0.0, %v749
        %v751 = vpop.f32.mrb[0].mxu0
        %v752 = vpop.f32.mrb[0].mxu0
        %v753 = vadd.f32 0.0, %v752
        %v754 = vpop.f32.mrb[0].mxu0
        %755 = vmatprep.mubr.bf16.mxu0 0
        %756 = vmatmul.mubr.bf16.gmra.mrb[0].mxu0 %v665
        %v757 = vpop.f32.mrb[0].mxu0
        %v758 = vadd.f32 0.0, %v757
        %v759 = vpop.f32.mrb[0].mxu0
        %v760 = vpop.f32.mrb[0].mxu0
        %v761 = vadd.f32 0.0, %v760
        %v762 = vpop.f32.mrb[0].mxu0
        %763 = vmatprep.mubr.bf16.mxu0 0
        %764 = vmatmul.mubr.bf16.gmra.mrb[0].mxu0 %v666
        %v765 = vpop.f32.mrb[0].mxu0
        %v766 = vadd.f32 0.0, %v765
        %v767 = vpop.f32.mrb[0].mxu0
        %v768 = vpop.f32.mrb[0].mxu0
        %v769 = vadd.f32 0.0, %v768
        %v770 = vpop.f32.mrb[0].mxu0
        %771 = vdwg.mxu0
        %v772 = vadd.f32 %v587, %v710
        %v773 = vadd.f32 %v588, %v713
        %v774 = vadd.f32 %v589, %v718
        %v775 = vadd.f32 %v590, %v721
        %v776 = vadd.f32 %v591, %v726
        %v777 = vadd.f32 %v592, %v729
        %v778 = vadd.f32 %v593, %v734
        %v779 = vadd.f32 %v594, %v737
        %v780 = vadd.f32 %v595, %v742
        %v781 = vadd.f32 %v596, %v745
        %v782 = vadd.f32 %v597, %v750
        %v783 = vadd.f32 %v598, %v753
        %v784 = vadd.f32 %v599, %v758
        %v785 = vadd.f32 %v600, %v761
        %v786 = vadd.f32 %v601, %v766
        %v787 = vadd.f32 %v602, %v769
        %788 = vst [vmem:[#allocation2] sm:$0xff] %v772
        %789 = vst [vmem:[#allocation2 + $0x8] sm:$0xff] %v773
        %790 = vst [vmem:[#allocation2 + $0x10] sm:$0xff] %v774
        %791 = vst [vmem:[#allocation2 + $0x18] sm:$0xff] %v775
        %792 = vst [vmem:[#allocation2 + $0x20] sm:$0xff] %v776
        %793 = vst [vmem:[#allocation2 + $0x28] sm:$0xff] %v777
        %794 = vst [vmem:[#allocation2 + $0x30] sm:$0xff] %v778
        %795 = vst [vmem:[#allocation2 + $0x38] sm:$0xff] %v779
        %796 = vst [vmem:[#allocation2 + $0x40] sm:$0xff] %v780
        %797 = vst [vmem:[#allocation2 + $0x48] sm:$0xff] %v781
        %798 = vst [vmem:[#allocation2 + $0x50] sm:$0xff] %v782
        %799 = vst [vmem:[#allocation2 + $0x58] sm:$0xff] %v783
        %800 = vst [vmem:[#allocation2 + $0x60] sm:$0xff] %v784
        %801 = vst [vmem:[#allocation2 + $0x68] sm:$0xff] %v785
        %802 = vst [vmem:[#allocation2 + $0x70] sm:$0xff] %v786
        %803 = vst [vmem:[#allocation2 + $0x78] sm:$0xff] %v787
        %p804 = scmp.eq.s32.totalorder %s21, 1
        // Predicated region
        $region86: #{gcn_forward.2} parent=76 // pred_check
          %p805 = pneg %p804
        $region87: #{gcn_forward.2} parent=76 // pred_check_branch
          %807 = sbr.rel (%p805) target = $region89
        $region88: #{gcn_forward.2} parent=76 // pred_region
          %v808 = vld [vmem:[#allocation2] sm:$0xff]
          %v809 = vld [vmem:[#allocation2 + $0x8] sm:$0xff]
          %v810 = vld [vmem:[#allocation2 + $0x10] sm:$0xff]
          %v811 = vld [vmem:[#allocation2 + $0x18] sm:$0xff]
          %v812 = vld [vmem:[#allocation2 + $0x20] sm:$0xff]
          %v813 = vld [vmem:[#allocation2 + $0x28] sm:$0xff]
          %v814 = vld [vmem:[#allocation2 + $0x30] sm:$0xff]
          %v815 = vld [vmem:[#allocation2 + $0x38] sm:$0xff]
          %v816 = vld [vmem:[#allocation2 + $0x40] sm:$0xff]
          %v817 = vld [vmem:[#allocation2 + $0x48] sm:$0xff]
          %v818 = vld [vmem:[#allocation2 + $0x50] sm:$0xff]
          %v819 = vld [vmem:[#allocation2 + $0x58] sm:$0xff]
          %v820 = vld [vmem:[#allocation2 + $0x60] sm:$0xff]
          %v821 = vld [vmem:[#allocation2 + $0x68] sm:$0xff]
          %v822 = vld [vmem:[#allocation2 + $0x70] sm:$0xff]
          %v823 = vld [vmem:[#allocation2 + $0x78] sm:$0xff]
          %v824 = vld [vmem:[%s3] sm:$0x1]
          %v826 = vlaneseq
          %v827 = vshrl.u32 %v826, 7
          %v828 = vsub.s32 0, %v827
          %v829 = vrot.slane %v824, %v828
          %v831 = vadd.f32 %v808, %v829
          %v832 = vadd.f32 %v809, %v829
          %v833 = vadd.f32 %v810, %v829
          %v834 = vadd.f32 %v811, %v829
          %v835 = vadd.f32 %v812, %v829
          %v836 = vadd.f32 %v813, %v829
          %v837 = vadd.f32 %v814, %v829
          %v838 = vadd.f32 %v815, %v829
          %v839 = vadd.f32 %v816, %v829
          %v840 = vadd.f32 %v817, %v829
          %v841 = vadd.f32 %v818, %v829
          %v842 = vadd.f32 %v819, %v829
          %v843 = vadd.f32 %v820, %v829
          %v844 = vadd.f32 %v821, %v829
          %v845 = vadd.f32 %v822, %v829
          %v846 = vadd.f32 %v823, %v829
          %v847 = vmax.f32 %v831, 0.0
          %v848 = vmax.f32 %v832, 0.0
          %v849 = vmax.f32 %v833, 0.0
          %v850 = vmax.f32 %v834, 0.0
          %v851 = vmax.f32 %v835, 0.0
          %v852 = vmax.f32 %v836, 0.0
          %v853 = vmax.f32 %v837, 0.0
          %v854 = vmax.f32 %v838, 0.0
          %v855 = vmax.f32 %v839, 0.0
          %v856 = vmax.f32 %v840, 0.0
          %v857 = vmax.f32 %v841, 0.0
          %v858 = vmax.f32 %v842, 0.0
          %v859 = vmax.f32 %v843, 0.0
          %v860 = vmax.f32 %v844, 0.0
          %v861 = vmax.f32 %v845, 0.0
          %v862 = vmax.f32 %v846, 0.0
          %v863 = vld [vmem:[%s381] sm:$0xff]
          %v864 = vld [vmem:[%s381 + $0x8] sm:$0xff]
          %v865 = vld [vmem:[%s381 + $0x10] sm:$0xff]
          %v866 = vld [vmem:[%s381 + $0x18] sm:$0xff]
          %v867 = vld [vmem:[%s381 + $0x20] sm:$0xff]
          %v868 = vld [vmem:[%s381 + $0x28] sm:$0xff]
          %v869 = vld [vmem:[%s381 + $0x30] sm:$0xff]
          %v870 = vld [vmem:[%s381 + $0x38] sm:$0xff]
          %v871 = vld [vmem:[%s381 + $0x40] sm:$0xff]
          %v872 = vld [vmem:[%s381 + $0x48] sm:$0xff]
          %v873 = vld [vmem:[%s381 + $0x50] sm:$0xff]
          %v874 = vld [vmem:[%s381 + $0x58] sm:$0xff]
          %v875 = vld [vmem:[%s381 + $0x60] sm:$0xff]
          %v876 = vld [vmem:[%s381 + $0x68] sm:$0xff]
          %v877 = vld [vmem:[%s381 + $0x70] sm:$0xff]
          %v878 = vld [vmem:[%s381 + $0x78] sm:$0xff]
          %v879 = vmul.f32 %v847, %v863
          %v880 = vmul.f32 %v848, %v864
          %v881 = vmul.f32 %v849, %v865
          %v882 = vmul.f32 %v850, %v866
          %v883 = vmul.f32 %v851, %v867
          %v884 = vmul.f32 %v852, %v868
          %v885 = vmul.f32 %v853, %v869
          %v886 = vmul.f32 %v854, %v870
          %v887 = vmul.f32 %v855, %v871
          %v888 = vmul.f32 %v856, %v872
          %v889 = vmul.f32 %v857, %v873
          %v890 = vmul.f32 %v858, %v874
          %v891 = vmul.f32 %v859, %v875
          %v892 = vmul.f32 %v860, %v876
          %v893 = vmul.f32 %v861, %v877
          %v894 = vmul.f32 %v862, %v878
          %895 = vst [vmem:[%s387] sm:$0xff] %v879
          %896 = vst [vmem:[%s387 + $0x8] sm:$0xff] %v880
          %897 = vst [vmem:[%s387 + $0x10] sm:$0xff] %v881
          %898 = vst [vmem:[%s387 + $0x18] sm:$0xff] %v882
          %899 = vst [vmem:[%s387 + $0x20] sm:$0xff] %v883
          %900 = vst [vmem:[%s387 + $0x28] sm:$0xff] %v884
          %901 = vst [vmem:[%s387 + $0x30] sm:$0xff] %v885
          %902 = vst [vmem:[%s387 + $0x38] sm:$0xff] %v886
          %903 = vst [vmem:[%s387 + $0x40] sm:$0xff] %v887
          %904 = vst [vmem:[%s387 + $0x48] sm:$0xff] %v888
          %905 = vst [vmem:[%s387 + $0x50] sm:$0xff] %v889
          %906 = vst [vmem:[%s387 + $0x58] sm:$0xff] %v890
          %907 = vst [vmem:[%s387 + $0x60] sm:$0xff] %v891
          %908 = vst [vmem:[%s387 + $0x68] sm:$0xff] %v892
          %909 = vst [vmem:[%s387 + $0x70] sm:$0xff] %v893
          %910 = vst [vmem:[%s387 + $0x78] sm:$0xff] %v894
        $region89: #{gcn_forward.2} parent=76 // pred_fallthru
          _
        %s911 = smul.u32 16, %s20
        %p912 = scmp.lt.s32.totalorder %s911, 31
        %s913 = scalar_select %p912, %s911, 31
        %s914 = smul.addr %s913, 8
        %s915 = scalar_lea.vmem %s5, %s914
        // Predicated region
        $region90: #{gcn_forward.2} parent=76 // pred_check
          %p916 = pneg %p168
        $region91: #{gcn_forward.2} parent=76 // pred_check_branch
          %918 = sbr.rel (%p916) target = $region93
        $region92: #{gcn_forward.2} parent=76 // pred_region
          %s919 = smul.u32 16, %s20
        $region93: #{gcn_forward.2} parent=76 // pred_fallthru
          _
      $region77: #{gcn_forward.2} parent=5 // pred_fallthru
        _
      %p920 = scmp.le.s32.totalorder 2, %s11
      // Predicated region
      $region94: #{gcn_forward.2} parent=5 // pred_check
        %p921 = pneg %p920
      $region95: #{gcn_forward.2} parent=5 // pred_check_branch
        %923 = sbr.rel (%p921) target = $region97
      $region96: #{gcn_forward.2} parent=5 // pred_region
        %s924 = ssub.s32 %s11, 2
        // Predicated region
        $region98: #{gcn_forward.2} parent=96 // pred_check
          %p925 = pneg %p174
        $region99: #{gcn_forward.2} parent=96 // pred_check_branch
          %927 = sbr.rel (%p925) target = $region101
        $region100: #{gcn_forward.2} parent=96 // pred_region
          %s928 = smul.u32 16, %s22
          %p929 = scmp.lt.s32.totalorder %s928, 31
          %s930 = scalar_select %p929, %s928, 31
          %s931 = smul.addr %s930, 8
          %s932 = scalar_lea.vmem %s5, %s931
        $region101: #{gcn_forward.2} parent=96 // pred_fallthru
          _
      $region97: #{gcn_forward.2} parent=5 // pred_fallthru
        _
    $region6: #{gcn_forward.2} parent=1 // loop_footer
      %s15 = sadd.s32 1, %s11
    $region7: #{gcn_forward.2} parent=1 // loop_footer_branch
      %10 = sbr.rel target = $region3
    $region8: #{gcn_forward.2} parent=1 // loop_exit
      _

</llo_original>
